<compile_context>
chip_gen: v7x
topology: tpu7x:2x2x1
jax: 0.10.0
libtpu: 0.0.40
codegen_flags: <defaults>
</compile_context>

<pallas_src>
import functools

import jax
import jax.numpy as jnp
from jax import lax
from jax.experimental import pallas as pl
from jax.experimental.pallas import tpu as pltpu

LEAKY_SLOPE = 0.01   # torch.nn.LeakyReLU default
LN_EPS = 1e-5        # torch.nn.LayerNorm default
LANE = 128


def _round_up(x, m):
    return (x + m - 1) // m * m


def _coord_mlp_kernel(coords_ref, wx_ref, wy_ref, bpe_ref,
                      w1_ref, b1_ref, w2_ref, b2_ref, o_ref,
                      *, n_points, input_dim):
    c = coords_ref[...]                                   # (blk, 2*N) f32
    blk = c.shape[0]
    f_pad = wx_ref.shape[-1]

    # ---- Point encoder (VPU): pe[b, d*N + n] = x_n*w0[d] + y_n*w1[d] + b[d] ----
    # Lane l belongs to point (l % n_points); expand each point's x / y coord
    # across its lanes with masked selects (N-1 selects per coordinate, all VPU;
    # no cross-lane matmul, no kron weight).
    lane_pt = lax.broadcasted_iota(jnp.int32, (blk, f_pad), 1) % n_points
    x_exp = jnp.broadcast_to(c[:, 0:1], (blk, f_pad))
    y_exp = jnp.broadcast_to(c[:, 1:2], (blk, f_pad))
    for n in range(1, n_points):
        sel = lane_pt == n
        x_exp = jnp.where(
            sel, jnp.broadcast_to(c[:, 2 * n:2 * n + 1], (blk, f_pad)), x_exp)
        y_exp = jnp.where(
            sel, jnp.broadcast_to(c[:, 2 * n + 1:2 * n + 2], (blk, f_pad)), y_exp)
    # Padded lanes (l >= input_dim) have zero weights/bias -> pe == 0 there.
    pe = x_exp * wx_ref[...] + y_exp * wy_ref[...] + bpe_ref[...]

    # ---- LayerNorm over the true input_dim features (biased variance) ---------
    inv_f = 1.0 / float(input_dim)
    mean = jnp.sum(pe, axis=-1, keepdims=True) * inv_f
    mean_sq = jnp.sum(pe * pe, axis=-1, keepdims=True) * inv_f
    var = mean_sq - mean * mean
    ln = (pe - mean) * lax.rsqrt(var + LN_EPS)
    # gamma/beta are folded into w1/b1; padded lanes are killed by zero w1 rows.

    # ---- MLP: Linear -> LeakyReLU -> Linear -> LeakyReLU (bf16 MXU, f32 acc) ---
    h1 = jnp.dot(ln.astype(jnp.bfloat16), w1_ref[...],
                 preferred_element_type=jnp.float32) + b1_ref[...]
    h1 = jnp.where(h1 >= 0, h1, LEAKY_SLOPE * h1)
    h2 = jnp.dot(h1.astype(jnp.bfloat16), w2_ref[...],
                 preferred_element_type=jnp.float32) + b2_ref[...]
    o_ref[...] = jnp.where(h2 >= 0, h2, LEAKY_SLOPE * h2)


@functools.partial(jax.jit,
                   static_argnames=("n_points", "input_dim",
                                    "coords_embedding_dim", "block_bs"))
def coord_mlp_encoder(coords, kparams, *, n_points, input_dim,
                      coords_embedding_dim, block_bs=256):
    """coords: (bs, 2*n_points) f32, interleaved (x1,y1,x2,y2,...).
    Returns (bs, coords_embedding_dim) f32."""
    bs, c_dim = coords.shape
    assert c_dim == 2 * n_points
    wx, wy, bpe, w1p, b1p, w2p, b2p = kparams
    f_pad = wx.shape[-1]
    e_pad = w1p.shape[-1]

    block_bs = max(8, min(block_bs, _round_up(bs, 8)))
    bs_pad = _round_up(bs, block_bs)
    if bs_pad != bs:
        coords = jnp.pad(coords, ((0, bs_pad - bs), (0, 0)))
    grid = (bs_pad // block_bs,)

    # VMEM budget: resident weights + double-buffered IO tiles + headroom for
    # f32 intermediates; capped well under v7x's 64 MiB per-core VMEM and never
    # below the default 16 MiB scope.
    weight_bytes = 3 * f_pad * 4 + f_pad * e_pad * 2 + e_pad * e_pad * 2 + 2 * e_pad * 4
    io_bytes = block_bs * (c_dim + e_pad) * 4
    scratch_bytes = 8 * block_bs * f_pad * 4
    vmem_limit = int(min(48 * 2 ** 20,
                         max(16 * 2 ** 20,
                             2 * weight_bytes + 3 * io_bytes + scratch_bytes)))

    kernel = functools.partial(_coord_mlp_kernel,
                               n_points=n_points, input_dim=input_dim)
    const = lambda i: (0, 0)
    out = pl.pallas_call(
        kernel,
        out_shape=jax.ShapeDtypeStruct((bs_pad, e_pad), jnp.float32),
        grid=grid,
        in_specs=[
            pl.BlockSpec((block_bs, c_dim), lambda i: (i, 0)),   # coords tile
            pl.BlockSpec((1, f_pad), const),                     # wx (resident)
            pl.BlockSpec((1, f_pad), const),                     # wy (resident)
            pl.BlockSpec((1, f_pad), const),                     # b_pe (resident)
            pl.BlockSpec((f_pad, e_pad), const),                 # w1 bf16 (resident)
            pl.BlockSpec((1, e_pad), const),                     # b1 (resident)
            pl.BlockSpec((e_pad, e_pad), const),                 # w2 bf16 (resident)
            pl.BlockSpec((1, e_pad), const),                     # b2 (resident)
        ],
        out_specs=pl.BlockSpec((block_bs, e_pad), lambda i: (i, 0)),
        compiler_params=pltpu.CompilerParams(
            dimension_semantics=("parallel",),
            vmem_limit_bytes=vmem_limit,
        ),
    )(coords, wx, wy, bpe, w1p, b1p, w2p, b2p)
    return out[:bs, :coords_embedding_dim]


def init_params(key, coords_np_dim, point_embedding_dim, coords_embedding_dim):
    """Original (torch-layout) parameters, all float32."""
    assert point_embedding_dim % 4 == 0
    n_points = coords_np_dim // 2
    input_dim = n_points * point_embedding_dim
    k = jax.random.split(key, 8)
    w_pe = 0.5 * jax.random.normal(k[0], (2, point_embedding_dim), jnp.float32)
    b_pe = 0.1 * jax.random.normal(k[1], (point_embedding_dim,), jnp.float32)
    gamma = 1.0 + 0.1 * jax.random.normal(k[2], (input_dim,), jnp.float32)
    beta = 0.1 * jax.random.normal(k[3], (input_dim,), jnp.float32)
    w1 = (jax.random.normal(k[4], (input_dim, coords_embedding_dim), jnp.float32)
          / jnp.sqrt(float(input_dim)))
    b1 = 0.1 * jax.random.normal(k[5], (coords_embedding_dim,), jnp.float32)
    w2 = (jax.random.normal(k[6], (coords_embedding_dim, coords_embedding_dim), jnp.float32)
          / jnp.sqrt(float(coords_embedding_dim)))
    b2 = 0.1 * jax.random.normal(k[7], (coords_embedding_dim,), jnp.float32)
    return (w_pe, b_pe, gamma, beta, w1, b1, w2, b2)


def prepare_params(params, *, n_points, point_embedding_dim, coords_embedding_dim):
    """Re-layout torch-style params for the kernel:
      * kernel feature lane l = d * n_points + n  (torch feature f = n * D + d),
      * LayerNorm gamma/beta folded into the first Linear,
      * feature dims zero-padded to multiples of 128 lanes,
      * MXU weights cast to bfloat16 (biases / point-encoder vectors stay f32)."""
    w_pe, b_pe, gamma, beta, w1, b1, w2, b2 = params
    n, d = n_points, point_embedding_dim
    f = n * d
    e = coords_embedding_dim
    f_pad = _round_up(f, LANE)
    e_pad = _round_up(e, LANE)

    lane = jnp.arange(f)
    d_idx = lane // n                    # embedding channel of kernel lane l
    perm = (lane % n) * d + d_idx        # torch feature index of kernel lane l

    wx = jnp.zeros((1, f_pad), jnp.float32).at[0, :f].set(w_pe[0, d_idx])
    wy = jnp.zeros((1, f_pad), jnp.float32).at[0, :f].set(w_pe[1, d_idx])
    bpe = jnp.zeros((1, f_pad), jnp.float32).at[0, :f].set(b_pe[d_idx])

    w1_fold = gamma[perm][:, None] * w1[perm, :]           # (f, e)
    b1_fold = beta @ w1 + b1                               # (e,)
    w1p = (jnp.zeros((f_pad, e_pad), jnp.float32)
           .at[:f, :e].set(w1_fold).astype(jnp.bfloat16))
    b1p = jnp.zeros((1, e_pad), jnp.float32).at[0, :e].set(b1_fold)
    w2p = (jnp.zeros((e_pad, e_pad), jnp.float32)
           .at[:e, :e].set(w2).astype(jnp.bfloat16))
    b2p = jnp.zeros((1, e_pad), jnp.float32).at[0, :e].set(b2)
    return (wx, wy, bpe, w1p, b1p, w2p, b2p)


def torch_reference(coords, params):
    """Pure-JAX f32 replica of the torch module's forward (original layout)."""
    w_pe, b_pe, gamma, beta, w1, b1, w2, b2 = params
    bs = coords.shape[0]
    pts = coords.reshape(bs, -1, 2)                        # (bs, N, 2)
    pe = jnp.einsum("bnc,cd->bnd", pts, w_pe) + b_pe       # per-point Linear(2, D)
    pe = pe.reshape(bs, -1)                                # (bs, N*D), point-major
    mean = pe.mean(-1, keepdims=True)
    var = ((pe - mean) ** 2).mean(-1, keepdims=True)
    ln = (pe - mean) / jnp.sqrt(var + LN_EPS) * gamma + beta
    h1 = ln @ w1 + b1
    h1 = jnp.where(h1 >= 0, h1, LEAKY_SLOPE * h1)
    h2 = h1 @ w2 + b2
    return jnp.where(h2 >= 0, h2, LEAKY_SLOPE * h2)


def matched_reference(coords, kparams, *, n_points, input_dim, coords_embedding_dim):
    """Pure-JAX replica of the kernel math (padded / permuted / bf16 weights)."""
    wx, wy, bpe, w1p, b1p, w2p, b2p = kparams
    f_pad = wx.shape[-1]
    l = jnp.arange(f_pad)
    xi = 2 * (l % n_points)
    x_exp = coords[:, xi]
    y_exp = coords[:, xi + 1]
    pe = x_exp * wx + y_exp * wy + bpe
    mean = jnp.sum(pe, -1, keepdims=True) / input_dim
    var = jnp.sum(pe * pe, -1, keepdims=True) / input_dim - mean * mean
    ln = (pe - mean) * lax.rsqrt(var + LN_EPS)
    h1 = ln.astype(jnp.bfloat16).astype(jnp.float32) @ w1p.astype(jnp.float32) + b1p
    h1 = jnp.where(h1 >= 0, h1, LEAKY_SLOPE * h1)
    h2 = h1.astype(jnp.bfloat16).astype(jnp.float32) @ w2p.astype(jnp.float32) + b2p
    h2 = jnp.where(h2 >= 0, h2, LEAKY_SLOPE * h2)
    return h2[:, :coords_embedding_dim]


if __name__ == "__main__":
    coords_np_dim = 8            # -> 4 (x, y) points per row
    point_embedding_dim = 16     # divisible by 4
    coords_embedding_dim = 32
    bs = 500                     # not a multiple of the block: exercises padding
    block_bs = 256

    n_points = coords_np_dim // 2
    input_dim = n_points * point_embedding_dim

    key = jax.random.PRNGKey(0)
    k_coords, k_params = jax.random.split(key)
    coords = jax.random.uniform(k_coords, (bs, coords_np_dim), jnp.float32,
                                minval=-1.0, maxval=1.0)
    params = init_params(k_params, coords_np_dim, point_embedding_dim,
                         coords_embedding_dim)
    kparams = prepare_params(params, n_points=n_points,
                             point_embedding_dim=point_embedding_dim,
                             coords_embedding_dim=coords_embedding_dim)

    out = coord_mlp_encoder(coords, kparams, n_points=n_points,
                            input_dim=input_dim,
                            coords_embedding_dim=coords_embedding_dim,
                            block_bs=block_bs)
    out = jax.block_until_ready(out)
    assert out.shape == (bs, coords_embedding_dim)

    matched = matched_reference(coords, kparams, n_points=n_points,
                                input_dim=input_dim,
                                coords_embedding_dim=coords_embedding_dim)
    ref = torch_reference(coords, params)
    assert jnp.allclose(out, matched, atol=5e-3, rtol=5e-3), (
        "kernel mismatch vs bf16-matched reference: "
        f"max|diff|={float(jnp.max(jnp.abs(out - matched))):.3e}")
    assert jnp.allclose(out, ref, atol=5e-2, rtol=5e-2), (
        "kernel mismatch vs f32 module reference: "
        f"max|diff|={float(jnp.max(jnp.abs(out - ref))):.3e}")
    print("KERNEL_OK")
</pallas_src>

<mosaic_0001>
module attributes {stable_mosaic.version = 11 : i64} {
  func.func @_coord_mlp_kernel(%arg0: i32, %arg1: memref<256x8xf32, #tpu.memory_space<vmem>>, %arg2: memref<1x128xf32, #tpu.memory_space<vmem>>, %arg3: memref<1x128xf32, #tpu.memory_space<vmem>>, %arg4: memref<1x128xf32, #tpu.memory_space<vmem>>, %arg5: memref<128x128xbf16, #tpu.memory_space<vmem>>, %arg6: memref<1x128xf32, #tpu.memory_space<vmem>>, %arg7: memref<128x128xbf16, #tpu.memory_space<vmem>>, %arg8: memref<1x128xf32, #tpu.memory_space<vmem>>, %arg9: memref<256x128xf32, #tpu.memory_space<vmem>>) attributes {dimension_semantics = [#tpu.dimension_semantics<parallel>], iteration_bounds = array<i64: 2>, scalar_prefetch = 0 : i64, scratch_operands = 0 : i64, tpu.core_type = #tpu.core_type<tc>, window_params = [{transform_indices = @transform_0, window_bounds = array<i64: 256, 8>}, {pipeline_mode = #tpu.pipeline_mode<synchronous>, transform_indices = @transform_1, window_bounds = array<i64: 1, 128>}, {pipeline_mode = #tpu.pipeline_mode<synchronous>, transform_indices = @transform_2, window_bounds = array<i64: 1, 128>}, {pipeline_mode = #tpu.pipeline_mode<synchronous>, transform_indices = @transform_3, window_bounds = array<i64: 1, 128>}, {pipeline_mode = #tpu.pipeline_mode<synchronous>, transform_indices = @transform_4, window_bounds = array<i64: 128, 128>}, {pipeline_mode = #tpu.pipeline_mode<synchronous>, transform_indices = @transform_5, window_bounds = array<i64: 1, 128>}, {pipeline_mode = #tpu.pipeline_mode<synchronous>, transform_indices = @transform_6, window_bounds = array<i64: 128, 128>}, {pipeline_mode = #tpu.pipeline_mode<synchronous>, transform_indices = @transform_7, window_bounds = array<i64: 1, 128>}, {transform_indices = @transform_8, window_bounds = array<i64: 256, 128>}]} {
    %c0 = arith.constant 0 : index
    %c0_0 = arith.constant 0 : index
    %0 = vector.load %arg1[%c0, %c0_0] : memref<256x8xf32, #tpu.memory_space<vmem>>, vector<256x8xf32>
    %1 = tpu.iota {dimensions = array<i32: 1>} : vector<256x128xi32>
    %c4_i32 = arith.constant 4 : i32
    %c0_i32 = arith.constant 0 : i32
    %2 = arith.cmpi eq, %c4_i32, %c0_i32 : i32
    %c1_i32 = arith.constant 1 : i32
    %3 = arith.select %2, %c1_i32, %c4_i32 : i32
    %4 = vector.broadcast %3 : i32 to vector<256x128xi32>
    %5 = arith.remsi %1, %4 : vector<256x128xi32>
    %c0_i32_1 = arith.constant 0 : i32
    %6 = vector.broadcast %c0_i32_1 : i32 to vector<256x128xi32>
    %7 = arith.cmpi ne, %5, %6 : vector<256x128xi32>
    %c0_i32_2 = arith.constant 0 : i32
    %8 = vector.broadcast %c0_i32_2 : i32 to vector<256x128xi32>
    %9 = arith.cmpi slt, %5, %8 : vector<256x128xi32>
    %c0_i32_3 = arith.constant 0 : i32
    %10 = arith.cmpi slt, %3, %c0_i32_3 : i32
    %11 = vector.broadcast %10 : i1 to vector<256x128xi1>
    %12 = vector.broadcast %11 : vector<256x128xi1> to vector<256x128xi1>
    %13 = arith.xori %9, %12 : vector<256x128xi1>
    %14 = arith.andi %13, %7 : vector<256x128xi1>
    %15 = vector.broadcast %3 : i32 to vector<256x128xi32>
    %16 = arith.addi %5, %15 : vector<256x128xi32>
    %17 = arith.select %14, %16, %5 : vector<256x128xi1>, vector<256x128xi32>
    %18 = vector.extract_strided_slice %0 {offsets = [0, 0], sizes = [256, 1], strides = [1, 1]} : vector<256x8xf32> to vector<256x1xf32>
    %19 = vector.shape_cast %18 : vector<256x1xf32> to vector<256x1xf32>
    %20 = vector.broadcast %19 : vector<256x1xf32> to vector<256x128xf32>
    %21 = vector.extract_strided_slice %0 {offsets = [0, 1], sizes = [256, 1], strides = [1, 1]} : vector<256x8xf32> to vector<256x1xf32>
    %22 = vector.shape_cast %21 : vector<256x1xf32> to vector<256x1xf32>
    %23 = vector.broadcast %22 : vector<256x1xf32> to vector<256x128xf32>
    %c1_i32_4 = arith.constant 1 : i32
    %24 = vector.broadcast %c1_i32_4 : i32 to vector<256x128xi32>
    %25 = arith.cmpi eq, %17, %24 : vector<256x128xi32>
    %26 = vector.extract_strided_slice %0 {offsets = [0, 2], sizes = [256, 1], strides = [1, 1]} : vector<256x8xf32> to vector<256x1xf32>
    %27 = vector.shape_cast %26 : vector<256x1xf32> to vector<256x1xf32>
    %28 = vector.broadcast %27 : vector<256x1xf32> to vector<256x128xf32>
    %29 = arith.select %25, %28, %20 : vector<256x128xi1>, vector<256x128xf32>
    %30 = vector.extract_strided_slice %0 {offsets = [0, 3], sizes = [256, 1], strides = [1, 1]} : vector<256x8xf32> to vector<256x1xf32>
    %31 = vector.shape_cast %30 : vector<256x1xf32> to vector<256x1xf32>
    %32 = vector.broadcast %31 : vector<256x1xf32> to vector<256x128xf32>
    %33 = arith.select %25, %32, %23 : vector<256x128xi1>, vector<256x128xf32>
    %c2_i32 = arith.constant 2 : i32
    %34 = vector.broadcast %c2_i32 : i32 to vector<256x128xi32>
    %35 = arith.cmpi eq, %17, %34 : vector<256x128xi32>
    %36 = vector.extract_strided_slice %0 {offsets = [0, 4], sizes = [256, 1], strides = [1, 1]} : vector<256x8xf32> to vector<256x1xf32>
    %37 = vector.shape_cast %36 : vector<256x1xf32> to vector<256x1xf32>
    %38 = vector.broadcast %37 : vector<256x1xf32> to vector<256x128xf32>
    %39 = arith.select %35, %38, %29 : vector<256x128xi1>, vector<256x128xf32>
    %40 = vector.extract_strided_slice %0 {offsets = [0, 5], sizes = [256, 1], strides = [1, 1]} : vector<256x8xf32> to vector<256x1xf32>
    %41 = vector.shape_cast %40 : vector<256x1xf32> to vector<256x1xf32>
    %42 = vector.broadcast %41 : vector<256x1xf32> to vector<256x128xf32>
    %43 = arith.select %35, %42, %33 : vector<256x128xi1>, vector<256x128xf32>
    %c3_i32 = arith.constant 3 : i32
    %44 = vector.broadcast %c3_i32 : i32 to vector<256x128xi32>
    %45 = arith.cmpi eq, %17, %44 : vector<256x128xi32>
    %46 = vector.extract_strided_slice %0 {offsets = [0, 6], sizes = [256, 1], strides = [1, 1]} : vector<256x8xf32> to vector<256x1xf32>
    %47 = vector.shape_cast %46 : vector<256x1xf32> to vector<256x1xf32>
    %48 = vector.broadcast %47 : vector<256x1xf32> to vector<256x128xf32>
    %49 = arith.select %45, %48, %39 : vector<256x128xi1>, vector<256x128xf32>
    %50 = vector.extract_strided_slice %0 {offsets = [0, 7], sizes = [256, 1], strides = [1, 1]} : vector<256x8xf32> to vector<256x1xf32>
    %51 = vector.shape_cast %50 : vector<256x1xf32> to vector<256x1xf32>
    %52 = vector.broadcast %51 : vector<256x1xf32> to vector<256x128xf32>
    %53 = arith.select %45, %52, %43 : vector<256x128xi1>, vector<256x128xf32>
    %c0_5 = arith.constant 0 : index
    %c0_6 = arith.constant 0 : index
    %54 = vector.load %arg2[%c0_5, %c0_6] : memref<1x128xf32, #tpu.memory_space<vmem>>, vector<1x128xf32>
    %55 = vector.broadcast %54 : vector<1x128xf32> to vector<256x128xf32>
    %56 = arith.mulf %49, %55 : vector<256x128xf32>
    %c0_7 = arith.constant 0 : index
    %c0_8 = arith.constant 0 : index
    %57 = vector.load %arg3[%c0_7, %c0_8] : memref<1x128xf32, #tpu.memory_space<vmem>>, vector<1x128xf32>
    %58 = vector.broadcast %57 : vector<1x128xf32> to vector<256x128xf32>
    %59 = arith.mulf %53, %58 : vector<256x128xf32>
    %60 = arith.addf %56, %59 : vector<256x128xf32>
    %c0_9 = arith.constant 0 : index
    %c0_10 = arith.constant 0 : index
    %61 = vector.load %arg4[%c0_9, %c0_10] : memref<1x128xf32, #tpu.memory_space<vmem>>, vector<1x128xf32>
    %62 = vector.broadcast %61 : vector<1x128xf32> to vector<256x128xf32>
    %63 = arith.addf %60, %62 : vector<256x128xf32>
    %cst = arith.constant dense<0.000000e+00> : vector<256xf32>
    %64 = vector.multi_reduction <add>, %63, %cst [1] : vector<256x128xf32> to vector<256xf32>
    %65 = vector.shape_cast %64 : vector<256xf32> to vector<256x1xf32>
    %cst_11 = arith.constant 1.562500e-02 : f32
    %66 = vector.broadcast %cst_11 : f32 to vector<256x1xf32>
    %67 = arith.mulf %65, %66 : vector<256x1xf32>
    %68 = arith.mulf %63, %63 : vector<256x128xf32>
    %cst_12 = arith.constant dense<0.000000e+00> : vector<256xf32>
    %69 = vector.multi_reduction <add>, %68, %cst_12 [1] : vector<256x128xf32> to vector<256xf32>
    %70 = vector.shape_cast %69 : vector<256xf32> to vector<256x1xf32>
    %cst_13 = arith.constant 1.562500e-02 : f32
    %71 = vector.broadcast %cst_13 : f32 to vector<256x1xf32>
    %72 = arith.mulf %70, %71 : vector<256x1xf32>
    %73 = arith.mulf %67, %67 : vector<256x1xf32>
    %74 = arith.subf %72, %73 : vector<256x1xf32>
    %75 = vector.broadcast %67 : vector<256x1xf32> to vector<256x128xf32>
    %76 = arith.subf %63, %75 : vector<256x128xf32>
    %cst_14 = arith.constant 9.99999974E-6 : f32
    %77 = vector.broadcast %cst_14 : f32 to vector<256x1xf32>
    %78 = arith.addf %74, %77 : vector<256x1xf32>
    %79 = math.rsqrt %78 : vector<256x1xf32>
    %80 = vector.broadcast %79 : vector<256x1xf32> to vector<256x128xf32>
    %81 = arith.mulf %76, %80 : vector<256x128xf32>
    %82 = arith.truncf %81 : vector<256x128xf32> to vector<256x128xbf16>
    %c0_15 = arith.constant 0 : index
    %c0_16 = arith.constant 0 : index
    %83 = vector.load %arg5[%c0_15, %c0_16] : memref<128x128xbf16, #tpu.memory_space<vmem>>, vector<128x128xbf16>
    %cst_17 = arith.constant dense<0.000000e+00> : vector<256x128xf32>
    %84 = tpu.matmul %82, %83, %cst_17 {dimension_numbers = #tpu.dot_dimension_numbers<[1], [0], [0], [1], [0, 0, 1, 1], [], []>} : vector<256x128xbf16>, vector<128x128xbf16>, vector<256x128xf32> -> vector<256x128xf32>
    %c0_18 = arith.constant 0 : index
    %c0_19 = arith.constant 0 : index
    %85 = vector.load %arg6[%c0_18, %c0_19] : memref<1x128xf32, #tpu.memory_space<vmem>>, vector<1x128xf32>
    %86 = vector.broadcast %85 : vector<1x128xf32> to vector<256x128xf32>
    %87 = arith.addf %84, %86 : vector<256x128xf32>
    %cst_20 = arith.constant 0.000000e+00 : f32
    %88 = vector.broadcast %cst_20 : f32 to vector<256x128xf32>
    %89 = arith.cmpf oge, %87, %88 : vector<256x128xf32>
    %cst_21 = arith.constant 0.00999999977 : f32
    %90 = vector.broadcast %cst_21 : f32 to vector<256x128xf32>
    %91 = arith.mulf %90, %87 : vector<256x128xf32>
    %92 = arith.select %89, %87, %91 : vector<256x128xi1>, vector<256x128xf32>
    %93 = arith.truncf %92 : vector<256x128xf32> to vector<256x128xbf16>
    %c0_22 = arith.constant 0 : index
    %c0_23 = arith.constant 0 : index
    %94 = vector.load %arg7[%c0_22, %c0_23] : memref<128x128xbf16, #tpu.memory_space<vmem>>, vector<128x128xbf16>
    %cst_24 = arith.constant dense<0.000000e+00> : vector<256x128xf32>
    %95 = tpu.matmul %93, %94, %cst_24 {dimension_numbers = #tpu.dot_dimension_numbers<[1], [0], [0], [1], [0, 0, 1, 1], [], []>} : vector<256x128xbf16>, vector<128x128xbf16>, vector<256x128xf32> -> vector<256x128xf32>
    %c0_25 = arith.constant 0 : index
    %c0_26 = arith.constant 0 : index
    %96 = vector.load %arg8[%c0_25, %c0_26] : memref<1x128xf32, #tpu.memory_space<vmem>>, vector<1x128xf32>
    %97 = vector.broadcast %96 : vector<1x128xf32> to vector<256x128xf32>
    %98 = arith.addf %95, %97 : vector<256x128xf32>
    %cst_27 = arith.constant 0.000000e+00 : f32
    %99 = vector.broadcast %cst_27 : f32 to vector<256x128xf32>
    %100 = arith.cmpf oge, %98, %99 : vector<256x128xf32>
    %cst_28 = arith.constant 0.00999999977 : f32
    %101 = vector.broadcast %cst_28 : f32 to vector<256x128xf32>
    %102 = arith.mulf %101, %98 : vector<256x128xf32>
    %103 = arith.select %100, %98, %102 : vector<256x128xi1>, vector<256x128xf32>
    %c0_29 = arith.constant 0 : index
    %c0_30 = arith.constant 0 : index
    %104 = vector.load %arg9[%c0_29, %c0_30] : memref<256x128xf32, #tpu.memory_space<vmem>>, vector<256x128xf32>
    tpu.vector_store %arg9[%c0_29, %c0_30], %103 {strides = array<i32>} : memref<256x128xf32, #tpu.memory_space<vmem>>, vector<256x128xf32>,
    return
  }
  func.func @transform_0(%arg0: i32) -> (i32, i32) {
    %c0_i32 = arith.constant 0 : i32
    %c0_i32_0 = arith.constant 0 : i32
    return %arg0, %c0_i32 : i32, i32
  }
  func.func @transform_1(%arg0: i32) -> (i32, i32) {
    %c0_i32 = arith.constant 0 : i32
    %c0_i32_0 = arith.constant 0 : i32
    %c0_i32_1 = arith.constant 0 : i32
    return %c0_i32, %c0_i32_0 : i32, i32
  }
  func.func @transform_2(%arg0: i32) -> (i32, i32) {
    %c0_i32 = arith.constant 0 : i32
    %c0_i32_0 = arith.constant 0 : i32
    %c0_i32_1 = arith.constant 0 : i32
    return %c0_i32, %c0_i32_0 : i32, i32
  }
  func.func @transform_3(%arg0: i32) -> (i32, i32) {
    %c0_i32 = arith.constant 0 : i32
    %c0_i32_0 = arith.constant 0 : i32
    %c0_i32_1 = arith.constant 0 : i32
    return %c0_i32, %c0_i32_0 : i32, i32
  }
  func.func @transform_4(%arg0: i32) -> (i32, i32) {
    %c0_i32 = arith.constant 0 : i32
    %c0_i32_0 = arith.constant 0 : i32
    %c0_i32_1 = arith.constant 0 : i32
    return %c0_i32, %c0_i32_0 : i32, i32
  }
  func.func @transform_5(%arg0: i32) -> (i32, i32) {
    %c0_i32 = arith.constant 0 : i32
    %c0_i32_0 = arith.constant 0 : i32
    %c0_i32_1 = arith.constant 0 : i32
    return %c0_i32, %c0_i32_0 : i32, i32
  }
  func.func @transform_6(%arg0: i32) -> (i32, i32) {
    %c0_i32 = arith.constant 0 : i32
    %c0_i32_0 = arith.constant 0 : i32
    %c0_i32_1 = arith.constant 0 : i32
    return %c0_i32, %c0_i32_0 : i32, i32
  }
  func.func @transform_7(%arg0: i32) -> (i32, i32) {
    %c0_i32 = arith.constant 0 : i32
    %c0_i32_0 = arith.constant 0 : i32
    %c0_i32_1 = arith.constant 0 : i32
    return %c0_i32, %c0_i32_0 : i32, i32
  }
  func.func @transform_8(%arg0: i32) -> (i32, i32) {
    %c0_i32 = arith.constant 0 : i32
    %c0_i32_0 = arith.constant 0 : i32
    return %arg0, %c0_i32 : i32, i32
  }
}

</mosaic_0001>

<llo_original>
// kernel: coord_mlp_encoder.1
$region0: #{coord_mlp_encoder.1}
  #allocation0 [shape = 'u32[]', space=smem, size = 0x4, offset = 0x4, fixed_abs, tag = 'smem constant byte address 0x4 - core index']
  #allocation1 [shape = 'u32[144,128]{1,0:T(1,128)}', space=vmem, size = 0x12000, scoped, tag = 'internal scratch']
  %s0 = inlined_call_operand.vmem [shape: f32[512,8], index: 0, kind: input, shape index: {}]
  %s1 = inlined_call_operand.vmem [shape: f32[1,128], index: 1, kind: input, shape index: {}]
  %s2 = inlined_call_operand.vmem [shape: f32[1,128], index: 2, kind: input, shape index: {}]
  %s3 = inlined_call_operand.vmem [shape: f32[1,128], index: 3, kind: input, shape index: {}]
  %s4 = inlined_call_operand.vmem [shape: bf16[128,128], index: 4, kind: input, shape index: {}]
  %s5 = inlined_call_operand.vmem [shape: f32[1,128], index: 5, kind: input, shape index: {}]
  %s6 = inlined_call_operand.vmem [shape: bf16[128,128], index: 6, kind: input, shape index: {}]
  %s7 = inlined_call_operand.vmem [shape: f32[1,128], index: 7, kind: input, shape index: {}]
  %s8 = inlined_call_operand.vmem [shape: f32[512,128], index: 8, kind: output, shape index: {}]
  %s9 = sld [smem:[#allocation0]]
  $region65: #{coord_mlp_encoder.1} parent=0
    _
  %s11 = ssub.s32 1, %s9
  %s12 = scalar_select 0, %s11, %s9
  loop: start=0, step=1, limit=4
  $region2: #{coord_mlp_encoder.1} parent=0 // loop_pre_header
    _
  $region3: #{coord_mlp_encoder.1} parent=0 // loop_header
    %s14 = sphi 0, %s18
    %p15 = scmp.ge.s32.totalorder %s14, 4
    %s24 = sphi 0, %s26
    %s27 = sphi 0, %s24
    %s28 = sphi 0, %s27
    %s44 = sphi 0, %s28
    %s48 = sphi 0, %s48
    %s50 = sphi 0, %s48
    %s51 = sphi 0, %s50
    %s65 = sphi 0, %s51
    %s69 = sphi 0, %s69
    %s71 = sphi 0, %s69
    %s72 = sphi 0, %s71
    %s86 = sphi 0, %s72
    %s90 = sphi 0, %s90
    %s92 = sphi 0, %s90
    %s93 = sphi 0, %s92
    %s107 = sphi 0, %s93
    %s111 = sphi 0, %s111
    %s113 = sphi 0, %s111
    %s114 = sphi 0, %s113
    %s128 = sphi 0, %s114
    %s132 = sphi 0, %s132
    %s134 = sphi 0, %s132
    %s135 = sphi 0, %s134
    %s149 = sphi 0, %s135
    %s153 = sphi 0, %s153
    %s155 = sphi 0, %s153
    %s156 = sphi 0, %s155
    %s170 = sphi 0, %s156
    %s174 = sphi 0, %s174
    %s176 = sphi 0, %s174
    %s177 = sphi 0, %s176
    %s191 = sphi 0, %s177
    %s197 = sphi 0, %s199
    %s200 = sphi 0, %s197
    %s201 = sphi 0, %s200
    %s217 = sphi 0, %s201
  $region4: #{coord_mlp_encoder.1} parent=0 // loop_header_branch
    %17 = sbr.rel (%p15) target = $region8
  $region5: #{coord_mlp_encoder.1} parent=0 // loop_body
    %s19 = ssub.s32 %s14, 1
    %s20 = ssub.s32 %s14, 2
    %s21 = sadd.s32 %s14, 1
    %s22 = ssub.s32 %s14, %s21
    %p23 = scmp.eq.s32.totalorder %s22, 0
    %s25 = sadd.s32 %s24, 1
    %s26 = scalar_select %p23, %s24, %s25
    %p29 = pneg %p23
    %p30 = scmp.eq.s32.totalorder %s14, 1
    %p31 = por %p29, %p30
    %p32 = scmp.ne.s32.totalorder %s24, %s27
    %p33 = scmp.eq.s32.totalorder %s14, 0
    %p34 = por %p32, %p33
    %p35 = scmp.ne.s32.totalorder %s24, %s27
    %p36 = scmp.eq.s32.totalorder %s19, 1
    %p37 = por %p35, %p36
    %p38 = scmp.ne.s32.totalorder %s27, %s28
    %p39 = scmp.eq.s32.totalorder %s19, 0
    %p40 = por %p38, %p39
    %p41 = scmp.ne.s32.totalorder %s27, %s28
    %p42 = scmp.eq.s32.totalorder %s20, 1
    %p43 = por %p41, %p42
    %p45 = scmp.ne.s32.totalorder %s28, %s44
    %p46 = scmp.eq.s32.totalorder %s20, 0
    %p47 = por %p45, %p46
    %s49 = sadd.s32 %s48, 1
    %p52 = scmp.eq.s32.totalorder %s14, 1
    %p53 = scmp.ne.s32.totalorder %s48, %s50
    %p54 = scmp.eq.s32.totalorder %s14, 0
    %p55 = por %p53, %p54
    %p56 = scmp.ne.s32.totalorder %s48, %s50
    %p57 = scmp.eq.s32.totalorder %s19, 1
    %p58 = por %p56, %p57
    %p59 = scmp.ne.s32.totalorder %s50, %s51
    %p60 = scmp.eq.s32.totalorder %s19, 0
    %p61 = por %p59, %p60
    %p62 = scmp.ne.s32.totalorder %s50, %s51
    %p63 = scmp.eq.s32.totalorder %s20, 1
    %p64 = por %p62, %p63
    %p66 = scmp.ne.s32.totalorder %s51, %s65
    %p67 = scmp.eq.s32.totalorder %s20, 0
    %p68 = por %p66, %p67
    %s70 = sadd.s32 %s69, 1
    %p73 = scmp.eq.s32.totalorder %s14, 1
    %p74 = scmp.ne.s32.totalorder %s69, %s71
    %p75 = scmp.eq.s32.totalorder %s14, 0
    %p76 = por %p74, %p75
    %p77 = scmp.ne.s32.totalorder %s69, %s71
    %p78 = scmp.eq.s32.totalorder %s19, 1
    %p79 = por %p77, %p78
    %p80 = scmp.ne.s32.totalorder %s71, %s72
    %p81 = scmp.eq.s32.totalorder %s19, 0
    %p82 = por %p80, %p81
    %p83 = scmp.ne.s32.totalorder %s71, %s72
    %p84 = scmp.eq.s32.totalorder %s20, 1
    %p85 = por %p83, %p84
    %p87 = scmp.ne.s32.totalorder %s72, %s86
    %p88 = scmp.eq.s32.totalorder %s20, 0
    %p89 = por %p87, %p88
    %s91 = sadd.s32 %s90, 1
    %p94 = scmp.eq.s32.totalorder %s14, 1
    %p95 = scmp.ne.s32.totalorder %s90, %s92
    %p96 = scmp.eq.s32.totalorder %s14, 0
    %p97 = por %p95, %p96
    %p98 = scmp.ne.s32.totalorder %s90, %s92
    %p99 = scmp.eq.s32.totalorder %s19, 1
    %p100 = por %p98, %p99
    %p101 = scmp.ne.s32.totalorder %s92, %s93
    %p102 = scmp.eq.s32.totalorder %s19, 0
    %p103 = por %p101, %p102
    %p104 = scmp.ne.s32.totalorder %s92, %s93
    %p105 = scmp.eq.s32.totalorder %s20, 1
    %p106 = por %p104, %p105
    %p108 = scmp.ne.s32.totalorder %s93, %s107
    %p109 = scmp.eq.s32.totalorder %s20, 0
    %p110 = por %p108, %p109
    %s112 = sadd.s32 %s111, 1
    %p115 = scmp.eq.s32.totalorder %s14, 1
    %p116 = scmp.ne.s32.totalorder %s111, %s113
    %p117 = scmp.eq.s32.totalorder %s14, 0
    %p118 = por %p116, %p117
    %p119 = scmp.ne.s32.totalorder %s111, %s113
    %p120 = scmp.eq.s32.totalorder %s19, 1
    %p121 = por %p119, %p120
    %p122 = scmp.ne.s32.totalorder %s113, %s114
    %p123 = scmp.eq.s32.totalorder %s19, 0
    %p124 = por %p122, %p123
    %p125 = scmp.ne.s32.totalorder %s113, %s114
    %p126 = scmp.eq.s32.totalorder %s20, 1
    %p127 = por %p125, %p126
    %p129 = scmp.ne.s32.totalorder %s114, %s128
    %p130 = scmp.eq.s32.totalorder %s20, 0
    %p131 = por %p129, %p130
    %s133 = sadd.s32 %s132, 1
    %p136 = scmp.eq.s32.totalorder %s14, 1
    %p137 = scmp.ne.s32.totalorder %s132, %s134
    %p138 = scmp.eq.s32.totalorder %s14, 0
    %p139 = por %p137, %p138
    %p140 = scmp.ne.s32.totalorder %s132, %s134
    %p141 = scmp.eq.s32.totalorder %s19, 1
    %p142 = por %p140, %p141
    %p143 = scmp.ne.s32.totalorder %s134, %s135
    %p144 = scmp.eq.s32.totalorder %s19, 0
    %p145 = por %p143, %p144
    %p146 = scmp.ne.s32.totalorder %s134, %s135
    %p147 = scmp.eq.s32.totalorder %s20, 1
    %p148 = por %p146, %p147
    %p150 = scmp.ne.s32.totalorder %s135, %s149
    %p151 = scmp.eq.s32.totalorder %s20, 0
    %p152 = por %p150, %p151
    %s154 = sadd.s32 %s153, 1
    %p157 = scmp.eq.s32.totalorder %s14, 1
    %p158 = scmp.ne.s32.totalorder %s153, %s155
    %p159 = scmp.eq.s32.totalorder %s14, 0
    %p160 = por %p158, %p159
    %p161 = scmp.ne.s32.totalorder %s153, %s155
    %p162 = scmp.eq.s32.totalorder %s19, 1
    %p163 = por %p161, %p162
    %p164 = scmp.ne.s32.totalorder %s155, %s156
    %p165 = scmp.eq.s32.totalorder %s19, 0
    %p166 = por %p164, %p165
    %p167 = scmp.ne.s32.totalorder %s155, %s156
    %p168 = scmp.eq.s32.totalorder %s20, 1
    %p169 = por %p167, %p168
    %p171 = scmp.ne.s32.totalorder %s156, %s170
    %p172 = scmp.eq.s32.totalorder %s20, 0
    %p173 = por %p171, %p172
    %s175 = sadd.s32 %s174, 1
    %p178 = scmp.eq.s32.totalorder %s14, 1
    %p179 = scmp.ne.s32.totalorder %s174, %s176
    %p180 = scmp.eq.s32.totalorder %s14, 0
    %p181 = por %p179, %p180
    %p182 = scmp.ne.s32.totalorder %s174, %s176
    %p183 = scmp.eq.s32.totalorder %s19, 1
    %p184 = por %p182, %p183
    %p185 = scmp.ne.s32.totalorder %s176, %s177
    %p186 = scmp.eq.s32.totalorder %s19, 0
    %p187 = por %p185, %p186
    %p188 = scmp.ne.s32.totalorder %s176, %s177
    %p189 = scmp.eq.s32.totalorder %s20, 1
    %p190 = por %p188, %p189
    %p192 = scmp.ne.s32.totalorder %s177, %s191
    %p193 = scmp.eq.s32.totalorder %s20, 0
    %p194 = por %p192, %p193
    %s195 = ssub.s32 %s14, %s21
    %p196 = scmp.eq.s32.totalorder %s195, 0
    %s198 = sadd.s32 %s197, 1
    %s199 = scalar_select %p196, %s197, %s198
    %p202 = pneg %p196
    %p203 = scmp.eq.s32.totalorder %s14, 1
    %p204 = por %p202, %p203
    %p205 = scmp.ne.s32.totalorder %s197, %s200
    %p206 = scmp.eq.s32.totalorder %s14, 0
    %p207 = por %p205, %p206
    %p208 = scmp.ne.s32.totalorder %s197, %s200
    %p209 = scmp.eq.s32.totalorder %s19, 1
    %p210 = por %p208, %p209
    %p211 = scmp.ne.s32.totalorder %s200, %s201
    %p212 = scmp.eq.s32.totalorder %s19, 0
    %p213 = por %p211, %p212
    %p214 = scmp.ne.s32.totalorder %s200, %s201
    %p215 = scmp.eq.s32.totalorder %s20, 1
    %p216 = por %p214, %p215
    %p218 = scmp.ne.s32.totalorder %s201, %s217
    %p219 = scmp.eq.s32.totalorder %s20, 0
    %p220 = por %p218, %p219
    %p221 = scmp.le.s32.totalorder 1, %s14
    %p222 = scmp.lt.s32.totalorder %s14, 3
    %p223 = pnand %p221, %p222
    %p224 = pneg %p223
    // Predicated region
    $region9: #{coord_mlp_encoder.1} parent=5 // pred_check
      _
    $region10: #{coord_mlp_encoder.1} parent=5 // pred_check_branch
      %226 = sbr.rel (%p223) target = $region12
    $region11: #{coord_mlp_encoder.1} parent=5 // pred_region
      %s227 = ssub.s32 %s14, 1
      // Predicated region
      $region13: #{coord_mlp_encoder.1} parent=11 // pred_check
        %p228 = pneg %p61
      $region14: #{coord_mlp_encoder.1} parent=11 // pred_check_branch
        %230 = sbr.rel (%p228) target = $region16
      $region15: #{coord_mlp_encoder.1} parent=11 // pred_region
        _
      $region16: #{coord_mlp_encoder.1} parent=11 // pred_fallthru
        _
      // Predicated region
      $region17: #{coord_mlp_encoder.1} parent=11 // pred_check
        %p231 = pneg %p82
      $region18: #{coord_mlp_encoder.1} parent=11 // pred_check_branch
        %233 = sbr.rel (%p231) target = $region20
      $region19: #{coord_mlp_encoder.1} parent=11 // pred_region
        _
      $region20: #{coord_mlp_encoder.1} parent=11 // pred_fallthru
        _
      // Predicated region
      $region21: #{coord_mlp_encoder.1} parent=11 // pred_check
        %p234 = pneg %p103
      $region22: #{coord_mlp_encoder.1} parent=11 // pred_check_branch
        %236 = sbr.rel (%p234) target = $region24
      $region23: #{coord_mlp_encoder.1} parent=11 // pred_region
        _
      $region24: #{coord_mlp_encoder.1} parent=11 // pred_fallthru
        _
      // Predicated region
      $region25: #{coord_mlp_encoder.1} parent=11 // pred_check
        %p237 = pneg %p124
      $region26: #{coord_mlp_encoder.1} parent=11 // pred_check_branch
        %239 = sbr.rel (%p237) target = $region28
      $region27: #{coord_mlp_encoder.1} parent=11 // pred_region
        _
      $region28: #{coord_mlp_encoder.1} parent=11 // pred_fallthru
        _
      // Predicated region
      $region29: #{coord_mlp_encoder.1} parent=11 // pred_check
        %p240 = pneg %p145
      $region30: #{coord_mlp_encoder.1} parent=11 // pred_check_branch
        %242 = sbr.rel (%p240) target = $region32
      $region31: #{coord_mlp_encoder.1} parent=11 // pred_region
        _
      $region32: #{coord_mlp_encoder.1} parent=11 // pred_fallthru
        _
      // Predicated region
      $region33: #{coord_mlp_encoder.1} parent=11 // pred_check
        %p243 = pneg %p166
      $region34: #{coord_mlp_encoder.1} parent=11 // pred_check_branch
        %245 = sbr.rel (%p243) target = $region36
      $region35: #{coord_mlp_encoder.1} parent=11 // pred_region
        _
      $region36: #{coord_mlp_encoder.1} parent=11 // pred_fallthru
        _
      // Predicated region
      $region37: #{coord_mlp_encoder.1} parent=11 // pred_check
        %p246 = pneg %p187
      $region38: #{coord_mlp_encoder.1} parent=11 // pred_check_branch
        %248 = sbr.rel (%p246) target = $region40
      $region39: #{coord_mlp_encoder.1} parent=11 // pred_region
        _
      $region40: #{coord_mlp_encoder.1} parent=11 // pred_fallthru
        _
    $region12: #{coord_mlp_encoder.1} parent=5 // pred_fallthru
      _
    %p249 = scmp.lt.s32.totalorder %s14, 2
    // Predicated region
    $region41: #{coord_mlp_encoder.1} parent=5 // pred_check
      %p250 = pneg %p249
    $region42: #{coord_mlp_encoder.1} parent=5 // pred_check_branch
      %252 = sbr.rel (%p250) target = $region44
    $region43: #{coord_mlp_encoder.1} parent=5 // pred_region
      // Predicated region
      $region45: #{coord_mlp_encoder.1} parent=43 // pred_check
        %p253 = pneg %p34
      $region46: #{coord_mlp_encoder.1} parent=43 // pred_check_branch
        %255 = sbr.rel (%p253) target = $region48
      $region47: #{coord_mlp_encoder.1} parent=43 // pred_region
        %s256 = smul.u32 32, %s14
        %p257 = scmp.lt.s32.totalorder %s256, 63
        %s258 = scalar_select %p257, %s256, 63
        %s259 = smul.addr %s258, 8
        %s260 = scalar_lea.vmem %s0, %s259
        %s261 = smul.u32 32, %s14
      $region48: #{coord_mlp_encoder.1} parent=43 // pred_fallthru
        _
    $region44: #{coord_mlp_encoder.1} parent=5 // pred_fallthru
      _
    %p262 = scmp.le.s32.totalorder 1, %s14
    %p263 = scmp.lt.s32.totalorder %s14, 3
    %p264 = pnand %p262, %p263
    %p265 = pneg %p264
    // Predicated region
    $region49: #{coord_mlp_encoder.1} parent=5 // pred_check
      _
    $region50: #{coord_mlp_encoder.1} parent=5 // pred_check_branch
      %267 = sbr.rel (%p264) target = $region52
    $region51: #{coord_mlp_encoder.1} parent=5 // pred_region
      %s268 = ssub.s32 %s14, 1
      %s269 = smul.u32 32, %s19
      %p270 = scmp.lt.s32.totalorder %s269, 63
      %s271 = scalar_select %p270, %s269, 63
      %s272 = smul.addr %s271, 8
      %s273 = scalar_lea.vmem %s0, %s272
      %p274 = pneg %p40
      %p275 = pneg %p37
      %p276 = pneg %p61
      %p277 = pneg %p58
      %p278 = pneg %p82
      %p279 = pneg %p79
      %p280 = pneg %p103
      %p281 = pneg %p100
      %p282 = pneg %p124
      %p283 = pneg %p121
      %p284 = pneg %p145
      %p285 = pneg %p142
      %p286 = pneg %p166
      %p287 = pneg %p163
      %p288 = pneg %p187
      %p289 = pneg %p184
      %p290 = pneg %p213
      %p291 = pneg %p210
      %s292 = smul.u32 32, %s19
      %p293 = scmp.lt.s32.totalorder %s292, 63
      %s294 = scalar_select %p293, %s292, 63
      %s295 = smul.addr %s294, 8
      %s296 = scalar_lea.vmem %s8, %s295
      %s297 = smul.u32 32, %s19
      %p298 = scmp.lt.s32.totalorder %s297, 63
      %s299 = scalar_select %p298, %s297, 63
      %s300 = smul.addr %s299, 8
      %s301 = scalar_lea.vmem %s0, %s300
      %s302 = smul.u32 32, %s19
      %s303 = smul.u32 32, %s19
      %p304 = scmp.lt.s32.totalorder %s303, 63
      %s305 = scalar_select %p304, %s303, 63
      %s306 = smul.addr %s305, 8
      %s307 = scalar_lea.vmem %s8, %s306
      %s308 = smul.u32 32, %s19
      %v310 = vld [vmem:[%s301] sm:$0xff]
      %v311 = vld [vmem:[%s301 + $0x8] sm:$0xff]
      %v312 = vld [vmem:[%s301 + $0x10] sm:$0xff]
      %v313 = vld [vmem:[%s301 + $0x18] sm:$0xff]
      %v314 = vld [vmem:[%s301 + $0x20] sm:$0xff]
      %v315 = vld [vmem:[%s301 + $0x28] sm:$0xff]
      %v316 = vld [vmem:[%s301 + $0x30] sm:$0xff]
      %v317 = vld [vmem:[%s301 + $0x38] sm:$0xff]
      %v318 = vld [vmem:[%s301 + $0x40] sm:$0xff]
      %v319 = vld [vmem:[%s301 + $0x48] sm:$0xff]
      %v320 = vld [vmem:[%s301 + $0x50] sm:$0xff]
      %v321 = vld [vmem:[%s301 + $0x58] sm:$0xff]
      %v322 = vld [vmem:[%s301 + $0x60] sm:$0xff]
      %v323 = vld [vmem:[%s301 + $0x68] sm:$0xff]
      %v324 = vld [vmem:[%s301 + $0x70] sm:$0xff]
      %v325 = vld [vmem:[%s301 + $0x78] sm:$0xff]
      %v326 = vld [vmem:[%s301 + $0x80] sm:$0xff]
      %v327 = vld [vmem:[%s301 + $0x88] sm:$0xff]
      %v328 = vld [vmem:[%s301 + $0x90] sm:$0xff]
      %v329 = vld [vmem:[%s301 + $0x98] sm:$0xff]
      %v330 = vld [vmem:[%s301 + $0xa0] sm:$0xff]
      %v331 = vld [vmem:[%s301 + $0xa8] sm:$0xff]
      %v332 = vld [vmem:[%s301 + $0xb0] sm:$0xff]
      %v333 = vld [vmem:[%s301 + $0xb8] sm:$0xff]
      %v334 = vld [vmem:[%s301 + $0xc0] sm:$0xff]
      %v335 = vld [vmem:[%s301 + $0xc8] sm:$0xff]
      %v336 = vld [vmem:[%s301 + $0xd0] sm:$0xff]
      %v337 = vld [vmem:[%s301 + $0xd8] sm:$0xff]
      %v338 = vld [vmem:[%s301 + $0xe0] sm:$0xff]
      %v339 = vld [vmem:[%s301 + $0xe8] sm:$0xff]
      %v340 = vld [vmem:[%s301 + $0xf0] sm:$0xff]
      %v341 = vld [vmem:[%s301 + $0xf8] sm:$0xff]
      %v342 = vlaneseq
      %v343 = vand.u32 %v342, 127
      %vm344 = vcmp.lt.s32.totalorder %v343, 0
      %v345 = vsub.s32 0, %v343
      %v346 = vsel %vm344, %v345, %v343
      %v347 = vshrl.u32 %v346, 2
      %v348 = vand.u32 %v346, 3
      %v349 = vsub.s32 0, %v348
      %v350 = vsel %vm344, %v349, %v348
      %vm351 = vcmp.ne.s32.totalorder %v350, 0
      %vm352 = vcmp.lt.s32.totalorder %v350, 0
      %vm353 = vmand %vm352, %vm351
      %v354 = vadd.s32 %v350, 4
      %v355 = vsel %vm353, %v354, %v350
      %357 = vset.pattern.permute.xlu0 0
      %358 = vperm.xlu0 %357, %v310
      %v359 = vpop.permute.xlu0 %358
      %362 = vset.pattern.permute.xlu0 0
      %363 = vperm.xlu0 %362, %v311
      %v364 = vpop.permute.xlu0 %363
      %367 = vset.pattern.permute.xlu0 0
      %368 = vperm.xlu0 %367, %v312
      %v369 = vpop.permute.xlu0 %368
      %372 = vset.pattern.permute.xlu0 0
      %373 = vperm.xlu0 %372, %v313
      %v374 = vpop.permute.xlu0 %373
      %377 = vset.pattern.permute.xlu0 0
      %378 = vperm.xlu0 %377, %v314
      %v379 = vpop.permute.xlu0 %378
      %382 = vset.pattern.permute.xlu0 0
      %383 = vperm.xlu0 %382, %v315
      %v384 = vpop.permute.xlu0 %383
      %387 = vset.pattern.permute.xlu0 0
      %388 = vperm.xlu0 %387, %v316
      %v389 = vpop.permute.xlu0 %388
      %392 = vset.pattern.permute.xlu0 0
      %393 = vperm.xlu0 %392, %v317
      %v394 = vpop.permute.xlu0 %393
      %397 = vset.pattern.permute.xlu0 0
      %398 = vperm.xlu0 %397, %v318
      %v399 = vpop.permute.xlu0 %398
      %402 = vset.pattern.permute.xlu0 0
      %403 = vperm.xlu0 %402, %v319
      %v404 = vpop.permute.xlu0 %403
      %407 = vset.pattern.permute.xlu0 0
      %408 = vperm.xlu0 %407, %v320
      %v409 = vpop.permute.xlu0 %408
      %412 = vset.pattern.permute.xlu0 0
      %413 = vperm.xlu0 %412, %v321
      %v414 = vpop.permute.xlu0 %413
      %417 = vset.pattern.permute.xlu0 0
      %418 = vperm.xlu0 %417, %v322
      %v419 = vpop.permute.xlu0 %418
      %422 = vset.pattern.permute.xlu0 0
      %423 = vperm.xlu0 %422, %v323
      %v424 = vpop.permute.xlu0 %423
      %427 = vset.pattern.permute.xlu0 0
      %428 = vperm.xlu0 %427, %v324
      %v429 = vpop.permute.xlu0 %428
      %432 = vset.pattern.permute.xlu0 0
      %433 = vperm.xlu0 %432, %v325
      %v434 = vpop.permute.xlu0 %433
      %437 = vset.pattern.permute.xlu0 0
      %438 = vperm.xlu0 %437, %v326
      %v439 = vpop.permute.xlu0 %438
      %442 = vset.pattern.permute.xlu0 0
      %443 = vperm.xlu0 %442, %v327
      %v444 = vpop.permute.xlu0 %443
      %447 = vset.pattern.permute.xlu0 0
      %448 = vperm.xlu0 %447, %v328
      %v449 = vpop.permute.xlu0 %448
      %452 = vset.pattern.permute.xlu0 0
      %453 = vperm.xlu0 %452, %v329
      %v454 = vpop.permute.xlu0 %453
      %457 = vset.pattern.permute.xlu0 0
      %458 = vperm.xlu0 %457, %v330
      %v459 = vpop.permute.xlu0 %458
      %462 = vset.pattern.permute.xlu0 0
      %463 = vperm.xlu0 %462, %v331
      %v464 = vpop.permute.xlu0 %463
      %467 = vset.pattern.permute.xlu0 0
      %468 = vperm.xlu0 %467, %v332
      %v469 = vpop.permute.xlu0 %468
      %472 = vset.pattern.permute.xlu0 0
      %473 = vperm.xlu0 %472, %v333
      %v474 = vpop.permute.xlu0 %473
      %477 = vset.pattern.permute.xlu0 0
      %478 = vperm.xlu0 %477, %v334
      %v479 = vpop.permute.xlu0 %478
      %482 = vset.pattern.permute.xlu0 0
      %483 = vperm.xlu0 %482, %v335
      %v484 = vpop.permute.xlu0 %483
      %487 = vset.pattern.permute.xlu0 0
      %488 = vperm.xlu0 %487, %v336
      %v489 = vpop.permute.xlu0 %488
      %492 = vset.pattern.permute.xlu0 0
      %493 = vperm.xlu0 %492, %v337
      %v494 = vpop.permute.xlu0 %493
      %497 = vset.pattern.permute.xlu0 0
      %498 = vperm.xlu0 %497, %v338
      %v499 = vpop.permute.xlu0 %498
      %502 = vset.pattern.permute.xlu0 0
      %503 = vperm.xlu0 %502, %v339
      %v504 = vpop.permute.xlu0 %503
      %507 = vset.pattern.permute.xlu0 0
      %508 = vperm.xlu0 %507, %v340
      %v509 = vpop.permute.xlu0 %508
      %512 = vset.pattern.permute.xlu0 0
      %513 = vperm.xlu0 %512, %v341
      %v514 = vpop.permute.xlu0 %513
      %516 = vset.pattern.permute.xlu0 1
      %517 = vperm.xlu0 %516, %v310
      %v518 = vpop.permute.xlu0 %517
      %520 = vset.pattern.permute.xlu0 1
      %521 = vperm.xlu0 %520, %v311
      %v522 = vpop.permute.xlu0 %521
      %524 = vset.pattern.permute.xlu0 1
      %525 = vperm.xlu0 %524, %v312
      %v526 = vpop.permute.xlu0 %525
      %528 = vset.pattern.permute.xlu0 1
      %529 = vperm.xlu0 %528, %v313
      %v530 = vpop.permute.xlu0 %529
      %532 = vset.pattern.permute.xlu0 1
      %533 = vperm.xlu0 %532, %v314
      %v534 = vpop.permute.xlu0 %533
      %536 = vset.pattern.permute.xlu0 1
      %537 = vperm.xlu0 %536, %v315
      %v538 = vpop.permute.xlu0 %537
      %540 = vset.pattern.permute.xlu0 1
      %541 = vperm.xlu0 %540, %v316
      %v542 = vpop.permute.xlu0 %541
      %544 = vset.pattern.permute.xlu0 1
      %545 = vperm.xlu0 %544, %v317
      %v546 = vpop.permute.xlu0 %545
      %548 = vset.pattern.permute.xlu0 1
      %549 = vperm.xlu0 %548, %v318
      %v550 = vpop.permute.xlu0 %549
      %552 = vset.pattern.permute.xlu0 1
      %553 = vperm.xlu0 %552, %v319
      %v554 = vpop.permute.xlu0 %553
      %556 = vset.pattern.permute.xlu0 1
      %557 = vperm.xlu0 %556, %v320
      %v558 = vpop.permute.xlu0 %557
      %560 = vset.pattern.permute.xlu0 1
      %561 = vperm.xlu0 %560, %v321
      %v562 = vpop.permute.xlu0 %561
      %564 = vset.pattern.permute.xlu0 1
      %565 = vperm.xlu0 %564, %v322
      %v566 = vpop.permute.xlu0 %565
      %568 = vset.pattern.permute.xlu0 1
      %569 = vperm.xlu0 %568, %v323
      %v570 = vpop.permute.xlu0 %569
      %572 = vset.pattern.permute.xlu0 1
      %573 = vperm.xlu0 %572, %v324
      %v574 = vpop.permute.xlu0 %573
      %576 = vset.pattern.permute.xlu0 1
      %577 = vperm.xlu0 %576, %v325
      %v578 = vpop.permute.xlu0 %577
      %580 = vset.pattern.permute.xlu0 1
      %581 = vperm.xlu0 %580, %v326
      %v582 = vpop.permute.xlu0 %581
      %584 = vset.pattern.permute.xlu0 1
      %585 = vperm.xlu0 %584, %v327
      %v586 = vpop.permute.xlu0 %585
      %588 = vset.pattern.permute.xlu0 1
      %589 = vperm.xlu0 %588, %v328
      %v590 = vpop.permute.xlu0 %589
      %592 = vset.pattern.permute.xlu0 1
      %593 = vperm.xlu0 %592, %v329
      %v594 = vpop.permute.xlu0 %593
      %596 = vset.pattern.permute.xlu0 1
      %597 = vperm.xlu0 %596, %v330
      %v598 = vpop.permute.xlu0 %597
      %600 = vset.pattern.permute.xlu0 1
      %601 = vperm.xlu0 %600, %v331
      %v602 = vpop.permute.xlu0 %601
      %604 = vset.pattern.permute.xlu0 1
      %605 = vperm.xlu0 %604, %v332
      %v606 = vpop.permute.xlu0 %605
      %608 = vset.pattern.permute.xlu0 1
      %609 = vperm.xlu0 %608, %v333
      %v610 = vpop.permute.xlu0 %609
      %612 = vset.pattern.permute.xlu0 1
      %613 = vperm.xlu0 %612, %v334
      %v614 = vpop.permute.xlu0 %613
      %616 = vset.pattern.permute.xlu0 1
      %617 = vperm.xlu0 %616, %v335
      %v618 = vpop.permute.xlu0 %617
      %620 = vset.pattern.permute.xlu0 1
      %621 = vperm.xlu0 %620, %v336
      %v622 = vpop.permute.xlu0 %621
      %624 = vset.pattern.permute.xlu0 1
      %625 = vperm.xlu0 %624, %v337
      %v626 = vpop.permute.xlu0 %625
      %628 = vset.pattern.permute.xlu0 1
      %629 = vperm.xlu0 %628, %v338
      %v630 = vpop.permute.xlu0 %629
      %632 = vset.pattern.permute.xlu0 1
      %633 = vperm.xlu0 %632, %v339
      %v634 = vpop.permute.xlu0 %633
      %636 = vset.pattern.permute.xlu0 1
      %637 = vperm.xlu0 %636, %v340
      %v638 = vpop.permute.xlu0 %637
      %640 = vset.pattern.permute.xlu0 1
      %641 = vperm.xlu0 %640, %v341
      %v642 = vpop.permute.xlu0 %641
      %vm644 = vcmp.eq.s32.totalorder %v355, 1
      %645 = vset.pattern.permute.xlu0 2
      %646 = vperm.xlu0 %645, %v310
      %v647 = vpop.permute.xlu0 %646
      %649 = vset.pattern.permute.xlu0 2
      %650 = vperm.xlu0 %649, %v311
      %v651 = vpop.permute.xlu0 %650
      %653 = vset.pattern.permute.xlu0 2
      %654 = vperm.xlu0 %653, %v312
      %v655 = vpop.permute.xlu0 %654
      %657 = vset.pattern.permute.xlu0 2
      %658 = vperm.xlu0 %657, %v313
      %v659 = vpop.permute.xlu0 %658
      %661 = vset.pattern.permute.xlu0 2
      %662 = vperm.xlu0 %661, %v314
      %v663 = vpop.permute.xlu0 %662
      %665 = vset.pattern.permute.xlu0 2
      %666 = vperm.xlu0 %665, %v315
      %v667 = vpop.permute.xlu0 %666
      %669 = vset.pattern.permute.xlu0 2
      %670 = vperm.xlu0 %669, %v316
      %v671 = vpop.permute.xlu0 %670
      %673 = vset.pattern.permute.xlu0 2
      %674 = vperm.xlu0 %673, %v317
      %v675 = vpop.permute.xlu0 %674
      %677 = vset.pattern.permute.xlu0 2
      %678 = vperm.xlu0 %677, %v318
      %v679 = vpop.permute.xlu0 %678
      %681 = vset.pattern.permute.xlu0 2
      %682 = vperm.xlu0 %681, %v319
      %v683 = vpop.permute.xlu0 %682
      %685 = vset.pattern.permute.xlu0 2
      %686 = vperm.xlu0 %685, %v320
      %v687 = vpop.permute.xlu0 %686
      %689 = vset.pattern.permute.xlu0 2
      %690 = vperm.xlu0 %689, %v321
      %v691 = vpop.permute.xlu0 %690
      %693 = vset.pattern.permute.xlu0 2
      %694 = vperm.xlu0 %693, %v322
      %v695 = vpop.permute.xlu0 %694
      %697 = vset.pattern.permute.xlu0 2
      %698 = vperm.xlu0 %697, %v323
      %v699 = vpop.permute.xlu0 %698
      %701 = vset.pattern.permute.xlu0 2
      %702 = vperm.xlu0 %701, %v324
      %v703 = vpop.permute.xlu0 %702
      %705 = vset.pattern.permute.xlu0 2
      %706 = vperm.xlu0 %705, %v325
      %v707 = vpop.permute.xlu0 %706
      %709 = vset.pattern.permute.xlu0 2
      %710 = vperm.xlu0 %709, %v326
      %v711 = vpop.permute.xlu0 %710
      %713 = vset.pattern.permute.xlu0 2
      %714 = vperm.xlu0 %713, %v327
      %v715 = vpop.permute.xlu0 %714
      %717 = vset.pattern.permute.xlu0 2
      %718 = vperm.xlu0 %717, %v328
      %v719 = vpop.permute.xlu0 %718
      %721 = vset.pattern.permute.xlu0 2
      %722 = vperm.xlu0 %721, %v329
      %v723 = vpop.permute.xlu0 %722
      %725 = vset.pattern.permute.xlu0 2
      %726 = vperm.xlu0 %725, %v330
      %v727 = vpop.permute.xlu0 %726
      %729 = vset.pattern.permute.xlu0 2
      %730 = vperm.xlu0 %729, %v331
      %v731 = vpop.permute.xlu0 %730
      %733 = vset.pattern.permute.xlu0 2
      %734 = vperm.xlu0 %733, %v332
      %v735 = vpop.permute.xlu0 %734
      %737 = vset.pattern.permute.xlu0 2
      %738 = vperm.xlu0 %737, %v333
      %v739 = vpop.permute.xlu0 %738
      %741 = vset.pattern.permute.xlu0 2
      %742 = vperm.xlu0 %741, %v334
      %v743 = vpop.permute.xlu0 %742
      %745 = vset.pattern.permute.xlu0 2
      %746 = vperm.xlu0 %745, %v335
      %v747 = vpop.permute.xlu0 %746
      %749 = vset.pattern.permute.xlu0 2
      %750 = vperm.xlu0 %749, %v336
      %v751 = vpop.permute.xlu0 %750
      %753 = vset.pattern.permute.xlu0 2
      %754 = vperm.xlu0 %753, %v337
      %v755 = vpop.permute.xlu0 %754
      %757 = vset.pattern.permute.xlu0 2
      %758 = vperm.xlu0 %757, %v338
      %v759 = vpop.permute.xlu0 %758
      %761 = vset.pattern.permute.xlu0 2
      %762 = vperm.xlu0 %761, %v339
      %v763 = vpop.permute.xlu0 %762
      %765 = vset.pattern.permute.xlu0 2
      %766 = vperm.xlu0 %765, %v340
      %v767 = vpop.permute.xlu0 %766
      %769 = vset.pattern.permute.xlu0 2
      %770 = vperm.xlu0 %769, %v341
      %v771 = vpop.permute.xlu0 %770
      %v773 = vsel %vm644, %v647, %v359
      %v774 = vsel %vm644, %v651, %v364
      %v775 = vsel %vm644, %v655, %v369
      %v776 = vsel %vm644, %v659, %v374
      %v777 = vsel %vm644, %v663, %v379
      %v778 = vsel %vm644, %v667, %v384
      %v779 = vsel %vm644, %v671, %v389
      %v780 = vsel %vm644, %v675, %v394
      %v781 = vsel %vm644, %v679, %v399
      %v782 = vsel %vm644, %v683, %v404
      %v783 = vsel %vm644, %v687, %v409
      %v784 = vsel %vm644, %v691, %v414
      %v785 = vsel %vm644, %v695, %v419
      %v786 = vsel %vm644, %v699, %v424
      %v787 = vsel %vm644, %v703, %v429
      %v788 = vsel %vm644, %v707, %v434
      %v789 = vsel %vm644, %v711, %v439
      %v790 = vsel %vm644, %v715, %v444
      %v791 = vsel %vm644, %v719, %v449
      %v792 = vsel %vm644, %v723, %v454
      %v793 = vsel %vm644, %v727, %v459
      %v794 = vsel %vm644, %v731, %v464
      %v795 = vsel %vm644, %v735, %v469
      %v796 = vsel %vm644, %v739, %v474
      %v797 = vsel %vm644, %v743, %v479
      %v798 = vsel %vm644, %v747, %v484
      %v799 = vsel %vm644, %v751, %v489
      %v800 = vsel %vm644, %v755, %v494
      %v801 = vsel %vm644, %v759, %v499
      %v802 = vsel %vm644, %v763, %v504
      %v803 = vsel %vm644, %v767, %v509
      %v804 = vsel %vm644, %v771, %v514
      %805 = vset.pattern.permute.xlu0 3
      %806 = vperm.xlu0 %805, %v310
      %v807 = vpop.permute.xlu0 %806
      %809 = vset.pattern.permute.xlu0 3
      %810 = vperm.xlu0 %809, %v311
      %v811 = vpop.permute.xlu0 %810
      %813 = vset.pattern.permute.xlu0 3
      %814 = vperm.xlu0 %813, %v312
      %v815 = vpop.permute.xlu0 %814
      %817 = vset.pattern.permute.xlu0 3
      %818 = vperm.xlu0 %817, %v313
      %v819 = vpop.permute.xlu0 %818
      %821 = vset.pattern.permute.xlu0 3
      %822 = vperm.xlu0 %821, %v314
      %v823 = vpop.permute.xlu0 %822
      %825 = vset.pattern.permute.xlu0 3
      %826 = vperm.xlu0 %825, %v315
      %v827 = vpop.permute.xlu0 %826
      %829 = vset.pattern.permute.xlu0 3
      %830 = vperm.xlu0 %829, %v316
      %v831 = vpop.permute.xlu0 %830
      %833 = vset.pattern.permute.xlu0 3
      %834 = vperm.xlu0 %833, %v317
      %v835 = vpop.permute.xlu0 %834
      %837 = vset.pattern.permute.xlu0 3
      %838 = vperm.xlu0 %837, %v318
      %v839 = vpop.permute.xlu0 %838
      %841 = vset.pattern.permute.xlu0 3
      %842 = vperm.xlu0 %841, %v319
      %v843 = vpop.permute.xlu0 %842
      %845 = vset.pattern.permute.xlu0 3
      %846 = vperm.xlu0 %845, %v320
      %v847 = vpop.permute.xlu0 %846
      %849 = vset.pattern.permute.xlu0 3
      %850 = vperm.xlu0 %849, %v321
      %v851 = vpop.permute.xlu0 %850
      %853 = vset.pattern.permute.xlu0 3
      %854 = vperm.xlu0 %853, %v322
      %v855 = vpop.permute.xlu0 %854
      %857 = vset.pattern.permute.xlu0 3
      %858 = vperm.xlu0 %857, %v323
      %v859 = vpop.permute.xlu0 %858
      %861 = vset.pattern.permute.xlu0 3
      %862 = vperm.xlu0 %861, %v324
      %v863 = vpop.permute.xlu0 %862
      %865 = vset.pattern.permute.xlu0 3
      %866 = vperm.xlu0 %865, %v325
      %v867 = vpop.permute.xlu0 %866
      %869 = vset.pattern.permute.xlu0 3
      %870 = vperm.xlu0 %869, %v326
      %v871 = vpop.permute.xlu0 %870
      %873 = vset.pattern.permute.xlu0 3
      %874 = vperm.xlu0 %873, %v327
      %v875 = vpop.permute.xlu0 %874
      %877 = vset.pattern.permute.xlu0 3
      %878 = vperm.xlu0 %877, %v328
      %v879 = vpop.permute.xlu0 %878
      %881 = vset.pattern.permute.xlu0 3
      %882 = vperm.xlu0 %881, %v329
      %v883 = vpop.permute.xlu0 %882
      %885 = vset.pattern.permute.xlu0 3
      %886 = vperm.xlu0 %885, %v330
      %v887 = vpop.permute.xlu0 %886
      %889 = vset.pattern.permute.xlu0 3
      %890 = vperm.xlu0 %889, %v331
      %v891 = vpop.permute.xlu0 %890
      %893 = vset.pattern.permute.xlu0 3
      %894 = vperm.xlu0 %893, %v332
      %v895 = vpop.permute.xlu0 %894
      %897 = vset.pattern.permute.xlu0 3
      %898 = vperm.xlu0 %897, %v333
      %v899 = vpop.permute.xlu0 %898
      %901 = vset.pattern.permute.xlu0 3
      %902 = vperm.xlu0 %901, %v334
      %v903 = vpop.permute.xlu0 %902
      %905 = vset.pattern.permute.xlu0 3
      %906 = vperm.xlu0 %905, %v335
      %v907 = vpop.permute.xlu0 %906
      %909 = vset.pattern.permute.xlu0 3
      %910 = vperm.xlu0 %909, %v336
      %v911 = vpop.permute.xlu0 %910
      %913 = vset.pattern.permute.xlu0 3
      %914 = vperm.xlu0 %913, %v337
      %v915 = vpop.permute.xlu0 %914
      %917 = vset.pattern.permute.xlu0 3
      %918 = vperm.xlu0 %917, %v338
      %v919 = vpop.permute.xlu0 %918
      %921 = vset.pattern.permute.xlu0 3
      %922 = vperm.xlu0 %921, %v339
      %v923 = vpop.permute.xlu0 %922
      %925 = vset.pattern.permute.xlu0 3
      %926 = vperm.xlu0 %925, %v340
      %v927 = vpop.permute.xlu0 %926
      %929 = vset.pattern.permute.xlu0 3
      %930 = vperm.xlu0 %929, %v341
      %v931 = vpop.permute.xlu0 %930
      %v933 = vsel %vm644, %v807, %v518
      %v934 = vsel %vm644, %v811, %v522
      %v935 = vsel %vm644, %v815, %v526
      %v936 = vsel %vm644, %v819, %v530
      %v937 = vsel %vm644, %v823, %v534
      %v938 = vsel %vm644, %v827, %v538
      %v939 = vsel %vm644, %v831, %v542
      %v940 = vsel %vm644, %v835, %v546
      %v941 = vsel %vm644, %v839, %v550
      %v942 = vsel %vm644, %v843, %v554
      %v943 = vsel %vm644, %v847, %v558
      %v944 = vsel %vm644, %v851, %v562
      %v945 = vsel %vm644, %v855, %v566
      %v946 = vsel %vm644, %v859, %v570
      %v947 = vsel %vm644, %v863, %v574
      %v948 = vsel %vm644, %v867, %v578
      %v949 = vsel %vm644, %v871, %v582
      %v950 = vsel %vm644, %v875, %v586
      %v951 = vsel %vm644, %v879, %v590
      %v952 = vsel %vm644, %v883, %v594
      %v953 = vsel %vm644, %v887, %v598
      %v954 = vsel %vm644, %v891, %v602
      %v955 = vsel %vm644, %v895, %v606
      %v956 = vsel %vm644, %v899, %v610
      %v957 = vsel %vm644, %v903, %v614
      %v958 = vsel %vm644, %v907, %v618
      %v959 = vsel %vm644, %v911, %v622
      %v960 = vsel %vm644, %v915, %v626
      %v961 = vsel %vm644, %v919, %v630
      %v962 = vsel %vm644, %v923, %v634
      %v963 = vsel %vm644, %v927, %v638
      %v964 = vsel %vm644, %v931, %v642
      %vm965 = vcmp.eq.s32.totalorder %v355, 2
      %966 = vset.pattern.permute.xlu0 4
      %967 = vperm.xlu0 %966, %v310
      %v968 = vpop.permute.xlu0 %967
      %970 = vset.pattern.permute.xlu0 4
      %971 = vperm.xlu0 %970, %v311
      %v972 = vpop.permute.xlu0 %971
      %974 = vset.pattern.permute.xlu0 4
      %975 = vperm.xlu0 %974, %v312
      %v976 = vpop.permute.xlu0 %975
      %978 = vset.pattern.permute.xlu0 4
      %979 = vperm.xlu0 %978, %v313
      %v980 = vpop.permute.xlu0 %979
      %982 = vset.pattern.permute.xlu0 4
      %983 = vperm.xlu0 %982, %v314
      %v984 = vpop.permute.xlu0 %983
      %986 = vset.pattern.permute.xlu0 4
      %987 = vperm.xlu0 %986, %v315
      %v988 = vpop.permute.xlu0 %987
      %990 = vset.pattern.permute.xlu0 4
      %991 = vperm.xlu0 %990, %v316
      %v992 = vpop.permute.xlu0 %991
      %994 = vset.pattern.permute.xlu0 4
      %995 = vperm.xlu0 %994, %v317
      %v996 = vpop.permute.xlu0 %995
      %998 = vset.pattern.permute.xlu0 4
      %999 = vperm.xlu0 %998, %v318
      %v1000 = vpop.permute.xlu0 %999
      %1002 = vset.pattern.permute.xlu0 4
      %1003 = vperm.xlu0 %1002, %v319
      %v1004 = vpop.permute.xlu0 %1003
      %1006 = vset.pattern.permute.xlu0 4
      %1007 = vperm.xlu0 %1006, %v320
      %v1008 = vpop.permute.xlu0 %1007
      %1010 = vset.pattern.permute.xlu0 4
      %1011 = vperm.xlu0 %1010, %v321
      %v1012 = vpop.permute.xlu0 %1011
      %1014 = vset.pattern.permute.xlu0 4
      %1015 = vperm.xlu0 %1014, %v322
      %v1016 = vpop.permute.xlu0 %1015
      %1018 = vset.pattern.permute.xlu0 4
      %1019 = vperm.xlu0 %1018, %v323
      %v1020 = vpop.permute.xlu0 %1019
      %1022 = vset.pattern.permute.xlu0 4
      %1023 = vperm.xlu0 %1022, %v324
      %v1024 = vpop.permute.xlu0 %1023
      %1026 = vset.pattern.permute.xlu0 4
      %1027 = vperm.xlu0 %1026, %v325
      %v1028 = vpop.permute.xlu0 %1027
      %1030 = vset.pattern.permute.xlu0 4
      %1031 = vperm.xlu0 %1030, %v326
      %v1032 = vpop.permute.xlu0 %1031
      %1034 = vset.pattern.permute.xlu0 4
      %1035 = vperm.xlu0 %1034, %v327
      %v1036 = vpop.permute.xlu0 %1035
      %1038 = vset.pattern.permute.xlu0 4
      %1039 = vperm.xlu0 %1038, %v328
      %v1040 = vpop.permute.xlu0 %1039
      %1042 = vset.pattern.permute.xlu0 4
      %1043 = vperm.xlu0 %1042, %v329
      %v1044 = vpop.permute.xlu0 %1043
      %1046 = vset.pattern.permute.xlu0 4
      %1047 = vperm.xlu0 %1046, %v330
      %v1048 = vpop.permute.xlu0 %1047
      %1050 = vset.pattern.permute.xlu0 4
      %1051 = vperm.xlu0 %1050, %v331
      %v1052 = vpop.permute.xlu0 %1051
      %1054 = vset.pattern.permute.xlu0 4
      %1055 = vperm.xlu0 %1054, %v332
      %v1056 = vpop.permute.xlu0 %1055
      %1058 = vset.pattern.permute.xlu0 4
      %1059 = vperm.xlu0 %1058, %v333
      %v1060 = vpop.permute.xlu0 %1059
      %1062 = vset.pattern.permute.xlu0 4
      %1063 = vperm.xlu0 %1062, %v334
      %v1064 = vpop.permute.xlu0 %1063
      %1066 = vset.pattern.permute.xlu0 4
      %1067 = vperm.xlu0 %1066, %v335
      %v1068 = vpop.permute.xlu0 %1067
      %1070 = vset.pattern.permute.xlu0 4
      %1071 = vperm.xlu0 %1070, %v336
      %v1072 = vpop.permute.xlu0 %1071
      %1074 = vset.pattern.permute.xlu0 4
      %1075 = vperm.xlu0 %1074, %v337
      %v1076 = vpop.permute.xlu0 %1075
      %1078 = vset.pattern.permute.xlu0 4
      %1079 = vperm.xlu0 %1078, %v338
      %v1080 = vpop.permute.xlu0 %1079
      %1082 = vset.pattern.permute.xlu0 4
      %1083 = vperm.xlu0 %1082, %v339
      %v1084 = vpop.permute.xlu0 %1083
      %1086 = vset.pattern.permute.xlu0 4
      %1087 = vperm.xlu0 %1086, %v340
      %v1088 = vpop.permute.xlu0 %1087
      %1090 = vset.pattern.permute.xlu0 4
      %1091 = vperm.xlu0 %1090, %v341
      %v1092 = vpop.permute.xlu0 %1091
      %v1094 = vsel %vm965, %v968, %v773
      %v1095 = vsel %vm965, %v972, %v774
      %v1096 = vsel %vm965, %v976, %v775
      %v1097 = vsel %vm965, %v980, %v776
      %v1098 = vsel %vm965, %v984, %v777
      %v1099 = vsel %vm965, %v988, %v778
      %v1100 = vsel %vm965, %v992, %v779
      %v1101 = vsel %vm965, %v996, %v780
      %v1102 = vsel %vm965, %v1000, %v781
      %v1103 = vsel %vm965, %v1004, %v782
      %v1104 = vsel %vm965, %v1008, %v783
      %v1105 = vsel %vm965, %v1012, %v784
      %v1106 = vsel %vm965, %v1016, %v785
      %v1107 = vsel %vm965, %v1020, %v786
      %v1108 = vsel %vm965, %v1024, %v787
      %v1109 = vsel %vm965, %v1028, %v788
      %v1110 = vsel %vm965, %v1032, %v789
      %v1111 = vsel %vm965, %v1036, %v790
      %v1112 = vsel %vm965, %v1040, %v791
      %v1113 = vsel %vm965, %v1044, %v792
      %v1114 = vsel %vm965, %v1048, %v793
      %v1115 = vsel %vm965, %v1052, %v794
      %v1116 = vsel %vm965, %v1056, %v795
      %v1117 = vsel %vm965, %v1060, %v796
      %v1118 = vsel %vm965, %v1064, %v797
      %v1119 = vsel %vm965, %v1068, %v798
      %v1120 = vsel %vm965, %v1072, %v799
      %v1121 = vsel %vm965, %v1076, %v800
      %v1122 = vsel %vm965, %v1080, %v801
      %v1123 = vsel %vm965, %v1084, %v802
      %v1124 = vsel %vm965, %v1088, %v803
      %v1125 = vsel %vm965, %v1092, %v804
      %1126 = vset.pattern.permute.xlu0 5
      %1127 = vperm.xlu0 %1126, %v310
      %v1128 = vpop.permute.xlu0 %1127
      %1130 = vset.pattern.permute.xlu0 5
      %1131 = vperm.xlu0 %1130, %v311
      %v1132 = vpop.permute.xlu0 %1131
      %1134 = vset.pattern.permute.xlu0 5
      %1135 = vperm.xlu0 %1134, %v312
      %v1136 = vpop.permute.xlu0 %1135
      %1138 = vset.pattern.permute.xlu0 5
      %1139 = vperm.xlu0 %1138, %v313
      %v1140 = vpop.permute.xlu0 %1139
      %1142 = vset.pattern.permute.xlu0 5
      %1143 = vperm.xlu0 %1142, %v314
      %v1144 = vpop.permute.xlu0 %1143
      %1146 = vset.pattern.permute.xlu0 5
      %1147 = vperm.xlu0 %1146, %v315
      %v1148 = vpop.permute.xlu0 %1147
      %1150 = vset.pattern.permute.xlu0 5
      %1151 = vperm.xlu0 %1150, %v316
      %v1152 = vpop.permute.xlu0 %1151
      %1154 = vset.pattern.permute.xlu0 5
      %1155 = vperm.xlu0 %1154, %v317
      %v1156 = vpop.permute.xlu0 %1155
      %1158 = vset.pattern.permute.xlu0 5
      %1159 = vperm.xlu0 %1158, %v318
      %v1160 = vpop.permute.xlu0 %1159
      %1162 = vset.pattern.permute.xlu0 5
      %1163 = vperm.xlu0 %1162, %v319
      %v1164 = vpop.permute.xlu0 %1163
      %1166 = vset.pattern.permute.xlu0 5
      %1167 = vperm.xlu0 %1166, %v320
      %v1168 = vpop.permute.xlu0 %1167
      %1170 = vset.pattern.permute.xlu0 5
      %1171 = vperm.xlu0 %1170, %v321
      %v1172 = vpop.permute.xlu0 %1171
      %1174 = vset.pattern.permute.xlu0 5
      %1175 = vperm.xlu0 %1174, %v322
      %v1176 = vpop.permute.xlu0 %1175
      %1178 = vset.pattern.permute.xlu0 5
      %1179 = vperm.xlu0 %1178, %v323
      %v1180 = vpop.permute.xlu0 %1179
      %1182 = vset.pattern.permute.xlu0 5
      %1183 = vperm.xlu0 %1182, %v324
      %v1184 = vpop.permute.xlu0 %1183
      %1186 = vset.pattern.permute.xlu0 5
      %1187 = vperm.xlu0 %1186, %v325
      %v1188 = vpop.permute.xlu0 %1187
      %1190 = vset.pattern.permute.xlu0 5
      %1191 = vperm.xlu0 %1190, %v326
      %v1192 = vpop.permute.xlu0 %1191
      %1194 = vset.pattern.permute.xlu0 5
      %1195 = vperm.xlu0 %1194, %v327
      %v1196 = vpop.permute.xlu0 %1195
      %1198 = vset.pattern.permute.xlu0 5
      %1199 = vperm.xlu0 %1198, %v328
      %v1200 = vpop.permute.xlu0 %1199
      %1202 = vset.pattern.permute.xlu0 5
      %1203 = vperm.xlu0 %1202, %v329
      %v1204 = vpop.permute.xlu0 %1203
      %1206 = vset.pattern.permute.xlu0 5
      %1207 = vperm.xlu0 %1206, %v330
      %v1208 = vpop.permute.xlu0 %1207
      %1210 = vset.pattern.permute.xlu0 5
      %1211 = vperm.xlu0 %1210, %v331
      %v1212 = vpop.permute.xlu0 %1211
      %1214 = vset.pattern.permute.xlu0 5
      %1215 = vperm.xlu0 %1214, %v332
      %v1216 = vpop.permute.xlu0 %1215
      %1218 = vset.pattern.permute.xlu0 5
      %1219 = vperm.xlu0 %1218, %v333
      %v1220 = vpop.permute.xlu0 %1219
      %1222 = vset.pattern.permute.xlu0 5
      %1223 = vperm.xlu0 %1222, %v334
      %v1224 = vpop.permute.xlu0 %1223
      %1226 = vset.pattern.permute.xlu0 5
      %1227 = vperm.xlu0 %1226, %v335
      %v1228 = vpop.permute.xlu0 %1227
      %1230 = vset.pattern.permute.xlu0 5
      %1231 = vperm.xlu0 %1230, %v336
      %v1232 = vpop.permute.xlu0 %1231
      %1234 = vset.pattern.permute.xlu0 5
      %1235 = vperm.xlu0 %1234, %v337
      %v1236 = vpop.permute.xlu0 %1235
      %1238 = vset.pattern.permute.xlu0 5
      %1239 = vperm.xlu0 %1238, %v338
      %v1240 = vpop.permute.xlu0 %1239
      %1242 = vset.pattern.permute.xlu0 5
      %1243 = vperm.xlu0 %1242, %v339
      %v1244 = vpop.permute.xlu0 %1243
      %1246 = vset.pattern.permute.xlu0 5
      %1247 = vperm.xlu0 %1246, %v340
      %v1248 = vpop.permute.xlu0 %1247
      %1250 = vset.pattern.permute.xlu0 5
      %1251 = vperm.xlu0 %1250, %v341
      %v1252 = vpop.permute.xlu0 %1251
      %v1254 = vsel %vm965, %v1128, %v933
      %v1255 = vsel %vm965, %v1132, %v934
      %v1256 = vsel %vm965, %v1136, %v935
      %v1257 = vsel %vm965, %v1140, %v936
      %v1258 = vsel %vm965, %v1144, %v937
      %v1259 = vsel %vm965, %v1148, %v938
      %v1260 = vsel %vm965, %v1152, %v939
      %v1261 = vsel %vm965, %v1156, %v940
      %v1262 = vsel %vm965, %v1160, %v941
      %v1263 = vsel %vm965, %v1164, %v942
      %v1264 = vsel %vm965, %v1168, %v943
      %v1265 = vsel %vm965, %v1172, %v944
      %v1266 = vsel %vm965, %v1176, %v945
      %v1267 = vsel %vm965, %v1180, %v946
      %v1268 = vsel %vm965, %v1184, %v947
      %v1269 = vsel %vm965, %v1188, %v948
      %v1270 = vsel %vm965, %v1192, %v949
      %v1271 = vsel %vm965, %v1196, %v950
      %v1272 = vsel %vm965, %v1200, %v951
      %v1273 = vsel %vm965, %v1204, %v952
      %v1274 = vsel %vm965, %v1208, %v953
      %v1275 = vsel %vm965, %v1212, %v954
      %v1276 = vsel %vm965, %v1216, %v955
      %v1277 = vsel %vm965, %v1220, %v956
      %v1278 = vsel %vm965, %v1224, %v957
      %v1279 = vsel %vm965, %v1228, %v958
      %v1280 = vsel %vm965, %v1232, %v959
      %v1281 = vsel %vm965, %v1236, %v960
      %v1282 = vsel %vm965, %v1240, %v961
      %v1283 = vsel %vm965, %v1244, %v962
      %v1284 = vsel %vm965, %v1248, %v963
      %v1285 = vsel %vm965, %v1252, %v964
      %vm1286 = vcmp.eq.s32.totalorder %v355, 3
      %1287 = vset.pattern.permute.xlu0 6
      %1288 = vperm.xlu0 %1287, %v310
      %v1289 = vpop.permute.xlu0 %1288
      %1291 = vset.pattern.permute.xlu0 6
      %1292 = vperm.xlu0 %1291, %v311
      %v1293 = vpop.permute.xlu0 %1292
      %1295 = vset.pattern.permute.xlu0 6
      %1296 = vperm.xlu0 %1295, %v312
      %v1297 = vpop.permute.xlu0 %1296
      %1299 = vset.pattern.permute.xlu0 6
      %1300 = vperm.xlu0 %1299, %v313
      %v1301 = vpop.permute.xlu0 %1300
      %1303 = vset.pattern.permute.xlu0 6
      %1304 = vperm.xlu0 %1303, %v314
      %v1305 = vpop.permute.xlu0 %1304
      %1307 = vset.pattern.permute.xlu0 6
      %1308 = vperm.xlu0 %1307, %v315
      %v1309 = vpop.permute.xlu0 %1308
      %1311 = vset.pattern.permute.xlu0 6
      %1312 = vperm.xlu0 %1311, %v316
      %v1313 = vpop.permute.xlu0 %1312
      %1315 = vset.pattern.permute.xlu0 6
      %1316 = vperm.xlu0 %1315, %v317
      %v1317 = vpop.permute.xlu0 %1316
      %1319 = vset.pattern.permute.xlu0 6
      %1320 = vperm.xlu0 %1319, %v318
      %v1321 = vpop.permute.xlu0 %1320
      %1323 = vset.pattern.permute.xlu0 6
      %1324 = vperm.xlu0 %1323, %v319
      %v1325 = vpop.permute.xlu0 %1324
      %1327 = vset.pattern.permute.xlu0 6
      %1328 = vperm.xlu0 %1327, %v320
      %v1329 = vpop.permute.xlu0 %1328
      %1331 = vset.pattern.permute.xlu0 6
      %1332 = vperm.xlu0 %1331, %v321
      %v1333 = vpop.permute.xlu0 %1332
      %1335 = vset.pattern.permute.xlu0 6
      %1336 = vperm.xlu0 %1335, %v322
      %v1337 = vpop.permute.xlu0 %1336
      %1339 = vset.pattern.permute.xlu0 6
      %1340 = vperm.xlu0 %1339, %v323
      %v1341 = vpop.permute.xlu0 %1340
      %1343 = vset.pattern.permute.xlu0 6
      %1344 = vperm.xlu0 %1343, %v324
      %v1345 = vpop.permute.xlu0 %1344
      %1347 = vset.pattern.permute.xlu0 6
      %1348 = vperm.xlu0 %1347, %v325
      %v1349 = vpop.permute.xlu0 %1348
      %1351 = vset.pattern.permute.xlu0 6
      %1352 = vperm.xlu0 %1351, %v326
      %v1353 = vpop.permute.xlu0 %1352
      %1355 = vset.pattern.permute.xlu0 6
      %1356 = vperm.xlu0 %1355, %v327
      %v1357 = vpop.permute.xlu0 %1356
      %1359 = vset.pattern.permute.xlu0 6
      %1360 = vperm.xlu0 %1359, %v328
      %v1361 = vpop.permute.xlu0 %1360
      %1363 = vset.pattern.permute.xlu0 6
      %1364 = vperm.xlu0 %1363, %v329
      %v1365 = vpop.permute.xlu0 %1364
      %1367 = vset.pattern.permute.xlu0 6
      %1368 = vperm.xlu0 %1367, %v330
      %v1369 = vpop.permute.xlu0 %1368
      %1371 = vset.pattern.permute.xlu0 6
      %1372 = vperm.xlu0 %1371, %v331
      %v1373 = vpop.permute.xlu0 %1372
      %1375 = vset.pattern.permute.xlu0 6
      %1376 = vperm.xlu0 %1375, %v332
      %v1377 = vpop.permute.xlu0 %1376
      %1379 = vset.pattern.permute.xlu0 6
      %1380 = vperm.xlu0 %1379, %v333
      %v1381 = vpop.permute.xlu0 %1380
      %1383 = vset.pattern.permute.xlu0 6
      %1384 = vperm.xlu0 %1383, %v334
      %v1385 = vpop.permute.xlu0 %1384
      %1387 = vset.pattern.permute.xlu0 6
      %1388 = vperm.xlu0 %1387, %v335
      %v1389 = vpop.permute.xlu0 %1388
      %1391 = vset.pattern.permute.xlu0 6
      %1392 = vperm.xlu0 %1391, %v336
      %v1393 = vpop.permute.xlu0 %1392
      %1395 = vset.pattern.permute.xlu0 6
      %1396 = vperm.xlu0 %1395, %v337
      %v1397 = vpop.permute.xlu0 %1396
      %1399 = vset.pattern.permute.xlu0 6
      %1400 = vperm.xlu0 %1399, %v338
      %v1401 = vpop.permute.xlu0 %1400
      %1403 = vset.pattern.permute.xlu0 6
      %1404 = vperm.xlu0 %1403, %v339
      %v1405 = vpop.permute.xlu0 %1404
      %1407 = vset.pattern.permute.xlu0 6
      %1408 = vperm.xlu0 %1407, %v340
      %v1409 = vpop.permute.xlu0 %1408
      %1411 = vset.pattern.permute.xlu0 6
      %1412 = vperm.xlu0 %1411, %v341
      %v1413 = vpop.permute.xlu0 %1412
      %v1415 = vsel %vm1286, %v1289, %v1094
      %v1416 = vsel %vm1286, %v1293, %v1095
      %v1417 = vsel %vm1286, %v1297, %v1096
      %v1418 = vsel %vm1286, %v1301, %v1097
      %v1419 = vsel %vm1286, %v1305, %v1098
      %v1420 = vsel %vm1286, %v1309, %v1099
      %v1421 = vsel %vm1286, %v1313, %v1100
      %v1422 = vsel %vm1286, %v1317, %v1101
      %v1423 = vsel %vm1286, %v1321, %v1102
      %v1424 = vsel %vm1286, %v1325, %v1103
      %v1425 = vsel %vm1286, %v1329, %v1104
      %v1426 = vsel %vm1286, %v1333, %v1105
      %v1427 = vsel %vm1286, %v1337, %v1106
      %v1428 = vsel %vm1286, %v1341, %v1107
      %v1429 = vsel %vm1286, %v1345, %v1108
      %v1430 = vsel %vm1286, %v1349, %v1109
      %v1431 = vsel %vm1286, %v1353, %v1110
      %v1432 = vsel %vm1286, %v1357, %v1111
      %v1433 = vsel %vm1286, %v1361, %v1112
      %v1434 = vsel %vm1286, %v1365, %v1113
      %v1435 = vsel %vm1286, %v1369, %v1114
      %v1436 = vsel %vm1286, %v1373, %v1115
      %v1437 = vsel %vm1286, %v1377, %v1116
      %v1438 = vsel %vm1286, %v1381, %v1117
      %v1439 = vsel %vm1286, %v1385, %v1118
      %v1440 = vsel %vm1286, %v1389, %v1119
      %v1441 = vsel %vm1286, %v1393, %v1120
      %v1442 = vsel %vm1286, %v1397, %v1121
      %v1443 = vsel %vm1286, %v1401, %v1122
      %v1444 = vsel %vm1286, %v1405, %v1123
      %v1445 = vsel %vm1286, %v1409, %v1124
      %v1446 = vsel %vm1286, %v1413, %v1125
      %1447 = vset.pattern.permute.xlu0 7
      %1448 = vperm.xlu0 %1447, %v310
      %v1449 = vpop.permute.xlu0 %1448
      %1451 = vset.pattern.permute.xlu0 7
      %1452 = vperm.xlu0 %1451, %v311
      %v1453 = vpop.permute.xlu0 %1452
      %1455 = vset.pattern.permute.xlu0 7
      %1456 = vperm.xlu0 %1455, %v312
      %v1457 = vpop.permute.xlu0 %1456
      %1459 = vset.pattern.permute.xlu0 7
      %1460 = vperm.xlu0 %1459, %v313
      %v1461 = vpop.permute.xlu0 %1460
      %1463 = vset.pattern.permute.xlu0 7
      %1464 = vperm.xlu0 %1463, %v314
      %v1465 = vpop.permute.xlu0 %1464
      %1467 = vset.pattern.permute.xlu0 7
      %1468 = vperm.xlu0 %1467, %v315
      %v1469 = vpop.permute.xlu0 %1468
      %1471 = vset.pattern.permute.xlu0 7
      %1472 = vperm.xlu0 %1471, %v316
      %v1473 = vpop.permute.xlu0 %1472
      %1475 = vset.pattern.permute.xlu0 7
      %1476 = vperm.xlu0 %1475, %v317
      %v1477 = vpop.permute.xlu0 %1476
      %1479 = vset.pattern.permute.xlu0 7
      %1480 = vperm.xlu0 %1479, %v318
      %v1481 = vpop.permute.xlu0 %1480
      %1483 = vset.pattern.permute.xlu0 7
      %1484 = vperm.xlu0 %1483, %v319
      %v1485 = vpop.permute.xlu0 %1484
      %1487 = vset.pattern.permute.xlu0 7
      %1488 = vperm.xlu0 %1487, %v320
      %v1489 = vpop.permute.xlu0 %1488
      %1491 = vset.pattern.permute.xlu0 7
      %1492 = vperm.xlu0 %1491, %v321
      %v1493 = vpop.permute.xlu0 %1492
      %1495 = vset.pattern.permute.xlu0 7
      %1496 = vperm.xlu0 %1495, %v322
      %v1497 = vpop.permute.xlu0 %1496
      %1499 = vset.pattern.permute.xlu0 7
      %1500 = vperm.xlu0 %1499, %v323
      %v1501 = vpop.permute.xlu0 %1500
      %1503 = vset.pattern.permute.xlu0 7
      %1504 = vperm.xlu0 %1503, %v324
      %v1505 = vpop.permute.xlu0 %1504
      %1507 = vset.pattern.permute.xlu0 7
      %1508 = vperm.xlu0 %1507, %v325
      %v1509 = vpop.permute.xlu0 %1508
      %1511 = vset.pattern.permute.xlu0 7
      %1512 = vperm.xlu0 %1511, %v326
      %v1513 = vpop.permute.xlu0 %1512
      %1515 = vset.pattern.permute.xlu0 7
      %1516 = vperm.xlu0 %1515, %v327
      %v1517 = vpop.permute.xlu0 %1516
      %1519 = vset.pattern.permute.xlu0 7
      %1520 = vperm.xlu0 %1519, %v328
      %v1521 = vpop.permute.xlu0 %1520
      %1523 = vset.pattern.permute.xlu0 7
      %1524 = vperm.xlu0 %1523, %v329
      %v1525 = vpop.permute.xlu0 %1524
      %1527 = vset.pattern.permute.xlu0 7
      %1528 = vperm.xlu0 %1527, %v330
      %v1529 = vpop.permute.xlu0 %1528
      %1531 = vset.pattern.permute.xlu0 7
      %1532 = vperm.xlu0 %1531, %v331
      %v1533 = vpop.permute.xlu0 %1532
      %1535 = vset.pattern.permute.xlu0 7
      %1536 = vperm.xlu0 %1535, %v332
      %v1537 = vpop.permute.xlu0 %1536
      %1539 = vset.pattern.permute.xlu0 7
      %1540 = vperm.xlu0 %1539, %v333
      %v1541 = vpop.permute.xlu0 %1540
      %1543 = vset.pattern.permute.xlu0 7
      %1544 = vperm.xlu0 %1543, %v334
      %v1545 = vpop.permute.xlu0 %1544
      %1547 = vset.pattern.permute.xlu0 7
      %1548 = vperm.xlu0 %1547, %v335
      %v1549 = vpop.permute.xlu0 %1548
      %1551 = vset.pattern.permute.xlu0 7
      %1552 = vperm.xlu0 %1551, %v336
      %v1553 = vpop.permute.xlu0 %1552
      %1555 = vset.pattern.permute.xlu0 7
      %1556 = vperm.xlu0 %1555, %v337
      %v1557 = vpop.permute.xlu0 %1556
      %1559 = vset.pattern.permute.xlu0 7
      %1560 = vperm.xlu0 %1559, %v338
      %v1561 = vpop.permute.xlu0 %1560
      %1563 = vset.pattern.permute.xlu0 7
      %1564 = vperm.xlu0 %1563, %v339
      %v1565 = vpop.permute.xlu0 %1564
      %1567 = vset.pattern.permute.xlu0 7
      %1568 = vperm.xlu0 %1567, %v340
      %v1569 = vpop.permute.xlu0 %1568
      %1571 = vset.pattern.permute.xlu0 7
      %1572 = vperm.xlu0 %1571, %v341
      %v1573 = vpop.permute.xlu0 %1572
      %v1575 = vsel %vm1286, %v1449, %v1254
      %v1576 = vsel %vm1286, %v1453, %v1255
      %v1577 = vsel %vm1286, %v1457, %v1256
      %v1578 = vsel %vm1286, %v1461, %v1257
      %v1579 = vsel %vm1286, %v1465, %v1258
      %v1580 = vsel %vm1286, %v1469, %v1259
      %v1581 = vsel %vm1286, %v1473, %v1260
      %v1582 = vsel %vm1286, %v1477, %v1261
      %v1583 = vsel %vm1286, %v1481, %v1262
      %v1584 = vsel %vm1286, %v1485, %v1263
      %v1585 = vsel %vm1286, %v1489, %v1264
      %v1586 = vsel %vm1286, %v1493, %v1265
      %v1587 = vsel %vm1286, %v1497, %v1266
      %v1588 = vsel %vm1286, %v1501, %v1267
      %v1589 = vsel %vm1286, %v1505, %v1268
      %v1590 = vsel %vm1286, %v1509, %v1269
      %v1591 = vsel %vm1286, %v1513, %v1270
      %v1592 = vsel %vm1286, %v1517, %v1271
      %v1593 = vsel %vm1286, %v1521, %v1272
      %v1594 = vsel %vm1286, %v1525, %v1273
      %v1595 = vsel %vm1286, %v1529, %v1274
      %v1596 = vsel %vm1286, %v1533, %v1275
      %v1597 = vsel %vm1286, %v1537, %v1276
      %v1598 = vsel %vm1286, %v1541, %v1277
      %v1599 = vsel %vm1286, %v1545, %v1278
      %v1600 = vsel %vm1286, %v1549, %v1279
      %v1601 = vsel %vm1286, %v1553, %v1280
      %v1602 = vsel %vm1286, %v1557, %v1281
      %v1603 = vsel %vm1286, %v1561, %v1282
      %v1604 = vsel %vm1286, %v1565, %v1283
      %v1605 = vsel %vm1286, %v1569, %v1284
      %v1606 = vsel %vm1286, %v1573, %v1285
      %v1607 = vld [vmem:[%s1] sm:$0x1]
      %v1609 = vlaneseq
      %v1610 = vshrl.u32 %v1609, 7
      %v1611 = vsub.s32 0, %v1610
      %v1612 = vrot.slane %v1607, %v1611
      %v1614 = vmul.f32 %v1415, %v1612
      %v1615 = vmul.f32 %v1416, %v1612
      %v1616 = vmul.f32 %v1417, %v1612
      %v1617 = vmul.f32 %v1418, %v1612
      %v1618 = vmul.f32 %v1419, %v1612
      %v1619 = vmul.f32 %v1420, %v1612
      %v1620 = vmul.f32 %v1421, %v1612
      %v1621 = vmul.f32 %v1422, %v1612
      %v1622 = vmul.f32 %v1423, %v1612
      %v1623 = vmul.f32 %v1424, %v1612
      %v1624 = vmul.f32 %v1425, %v1612
      %v1625 = vmul.f32 %v1426, %v1612
      %v1626 = vmul.f32 %v1427, %v1612
      %v1627 = vmul.f32 %v1428, %v1612
      %v1628 = vmul.f32 %v1429, %v1612
      %v1629 = vmul.f32 %v1430, %v1612
      %v1630 = vmul.f32 %v1431, %v1612
      %v1631 = vmul.f32 %v1432, %v1612
      %v1632 = vmul.f32 %v1433, %v1612
      %v1633 = vmul.f32 %v1434, %v1612
      %v1634 = vmul.f32 %v1435, %v1612
      %v1635 = vmul.f32 %v1436, %v1612
      %v1636 = vmul.f32 %v1437, %v1612
      %v1637 = vmul.f32 %v1438, %v1612
      %v1638 = vmul.f32 %v1439, %v1612
      %v1639 = vmul.f32 %v1440, %v1612
      %v1640 = vmul.f32 %v1441, %v1612
      %v1641 = vmul.f32 %v1442, %v1612
      %v1642 = vmul.f32 %v1443, %v1612
      %v1643 = vmul.f32 %v1444, %v1612
      %v1644 = vmul.f32 %v1445, %v1612
      %v1645 = vmul.f32 %v1446, %v1612
      %v1646 = vld [vmem:[%s2] sm:$0x1]
      %v1648 = vlaneseq
      %v1649 = vshrl.u32 %v1648, 7
      %v1650 = vsub.s32 0, %v1649
      %v1651 = vrot.slane %v1646, %v1650
      %v1653 = vmul.f32 %v1575, %v1651
      %v1654 = vmul.f32 %v1576, %v1651
      %v1655 = vmul.f32 %v1577, %v1651
      %v1656 = vmul.f32 %v1578, %v1651
      %v1657 = vmul.f32 %v1579, %v1651
      %v1658 = vmul.f32 %v1580, %v1651
      %v1659 = vmul.f32 %v1581, %v1651
      %v1660 = vmul.f32 %v1582, %v1651
      %v1661 = vmul.f32 %v1583, %v1651
      %v1662 = vmul.f32 %v1584, %v1651
      %v1663 = vmul.f32 %v1585, %v1651
      %v1664 = vmul.f32 %v1586, %v1651
      %v1665 = vmul.f32 %v1587, %v1651
      %v1666 = vmul.f32 %v1588, %v1651
      %v1667 = vmul.f32 %v1589, %v1651
      %v1668 = vmul.f32 %v1590, %v1651
      %v1669 = vmul.f32 %v1591, %v1651
      %v1670 = vmul.f32 %v1592, %v1651
      %v1671 = vmul.f32 %v1593, %v1651
      %v1672 = vmul.f32 %v1594, %v1651
      %v1673 = vmul.f32 %v1595, %v1651
      %v1674 = vmul.f32 %v1596, %v1651
      %v1675 = vmul.f32 %v1597, %v1651
      %v1676 = vmul.f32 %v1598, %v1651
      %v1677 = vmul.f32 %v1599, %v1651
      %v1678 = vmul.f32 %v1600, %v1651
      %v1679 = vmul.f32 %v1601, %v1651
      %v1680 = vmul.f32 %v1602, %v1651
      %v1681 = vmul.f32 %v1603, %v1651
      %v1682 = vmul.f32 %v1604, %v1651
      %v1683 = vmul.f32 %v1605, %v1651
      %v1684 = vmul.f32 %v1606, %v1651
      %v1685 = vadd.f32 %v1614, %v1653
      %v1686 = vadd.f32 %v1615, %v1654
      %v1687 = vadd.f32 %v1616, %v1655
      %v1688 = vadd.f32 %v1617, %v1656
      %v1689 = vadd.f32 %v1618, %v1657
      %v1690 = vadd.f32 %v1619, %v1658
      %v1691 = vadd.f32 %v1620, %v1659
      %v1692 = vadd.f32 %v1621, %v1660
      %v1693 = vadd.f32 %v1622, %v1661
      %v1694 = vadd.f32 %v1623, %v1662
      %v1695 = vadd.f32 %v1624, %v1663
      %v1696 = vadd.f32 %v1625, %v1664
      %v1697 = vadd.f32 %v1626, %v1665
      %v1698 = vadd.f32 %v1627, %v1666
      %v1699 = vadd.f32 %v1628, %v1667
      %v1700 = vadd.f32 %v1629, %v1668
      %v1701 = vadd.f32 %v1630, %v1669
      %v1702 = vadd.f32 %v1631, %v1670
      %v1703 = vadd.f32 %v1632, %v1671
      %v1704 = vadd.f32 %v1633, %v1672
      %v1705 = vadd.f32 %v1634, %v1673
      %v1706 = vadd.f32 %v1635, %v1674
      %v1707 = vadd.f32 %v1636, %v1675
      %v1708 = vadd.f32 %v1637, %v1676
      %v1709 = vadd.f32 %v1638, %v1677
      %v1710 = vadd.f32 %v1639, %v1678
      %v1711 = vadd.f32 %v1640, %v1679
      %v1712 = vadd.f32 %v1641, %v1680
      %v1713 = vadd.f32 %v1642, %v1681
      %v1714 = vadd.f32 %v1643, %v1682
      %v1715 = vadd.f32 %v1644, %v1683
      %v1716 = vadd.f32 %v1645, %v1684
      %v1717 = vld [vmem:[%s3] sm:$0x1]
      %v1719 = vlaneseq
      %v1720 = vshrl.u32 %v1719, 7
      %v1721 = vsub.s32 0, %v1720
      %v1722 = vrot.slane %v1717, %v1721
      %v1724 = vadd.f32 %v1685, %v1722
      %v1725 = vadd.f32 %v1686, %v1722
      %v1726 = vadd.f32 %v1687, %v1722
      %v1727 = vadd.f32 %v1688, %v1722
      %v1728 = vadd.f32 %v1689, %v1722
      %v1729 = vadd.f32 %v1690, %v1722
      %v1730 = vadd.f32 %v1691, %v1722
      %v1731 = vadd.f32 %v1692, %v1722
      %v1732 = vadd.f32 %v1693, %v1722
      %v1733 = vadd.f32 %v1694, %v1722
      %v1734 = vadd.f32 %v1695, %v1722
      %v1735 = vadd.f32 %v1696, %v1722
      %v1736 = vadd.f32 %v1697, %v1722
      %v1737 = vadd.f32 %v1698, %v1722
      %v1738 = vadd.f32 %v1699, %v1722
      %v1739 = vadd.f32 %v1700, %v1722
      %v1740 = vadd.f32 %v1701, %v1722
      %v1741 = vadd.f32 %v1702, %v1722
      %v1742 = vadd.f32 %v1703, %v1722
      %v1743 = vadd.f32 %v1704, %v1722
      %v1744 = vadd.f32 %v1705, %v1722
      %v1745 = vadd.f32 %v1706, %v1722
      %v1746 = vadd.f32 %v1707, %v1722
      %v1747 = vadd.f32 %v1708, %v1722
      %v1748 = vadd.f32 %v1709, %v1722
      %v1749 = vadd.f32 %v1710, %v1722
      %v1750 = vadd.f32 %v1711, %v1722
      %v1751 = vadd.f32 %v1712, %v1722
      %v1752 = vadd.f32 %v1713, %v1722
      %v1753 = vadd.f32 %v1714, %v1722
      %v1754 = vadd.f32 %v1715, %v1722
      %v1755 = vadd.f32 %v1716, %v1722
      %1756 = vadd.xlane.f32.xlu0 %v1724
      %v1757 = vpop.xlane.xlu0 %1756
      %1758 = vadd.xlane.f32.xlu0 %v1725
      %v1759 = vpop.xlane.xlu0 %1758
      %1760 = vadd.xlane.f32.xlu0 %v1726
      %v1761 = vpop.xlane.xlu0 %1760
      %1762 = vadd.xlane.f32.xlu0 %v1727
      %v1763 = vpop.xlane.xlu0 %1762
      %1764 = vadd.xlane.f32.xlu0 %v1728
      %v1765 = vpop.xlane.xlu0 %1764
      %1766 = vadd.xlane.f32.xlu0 %v1729
      %v1767 = vpop.xlane.xlu0 %1766
      %1768 = vadd.xlane.f32.xlu0 %v1730
      %v1769 = vpop.xlane.xlu0 %1768
      %1770 = vadd.xlane.f32.xlu0 %v1731
      %v1771 = vpop.xlane.xlu0 %1770
      %1772 = vadd.xlane.f32.xlu0 %v1732
      %v1773 = vpop.xlane.xlu0 %1772
      %1774 = vadd.xlane.f32.xlu0 %v1733
      %v1775 = vpop.xlane.xlu0 %1774
      %1776 = vadd.xlane.f32.xlu0 %v1734
      %v1777 = vpop.xlane.xlu0 %1776
      %1778 = vadd.xlane.f32.xlu0 %v1735
      %v1779 = vpop.xlane.xlu0 %1778
      %1780 = vadd.xlane.f32.xlu0 %v1736
      %v1781 = vpop.xlane.xlu0 %1780
      %1782 = vadd.xlane.f32.xlu0 %v1737
      %v1783 = vpop.xlane.xlu0 %1782
      %1784 = vadd.xlane.f32.xlu0 %v1738
      %v1785 = vpop.xlane.xlu0 %1784
      %1786 = vadd.xlane.f32.xlu0 %v1739
      %v1787 = vpop.xlane.xlu0 %1786
      %1788 = vadd.xlane.f32.xlu0 %v1740
      %v1789 = vpop.xlane.xlu0 %1788
      %1790 = vadd.xlane.f32.xlu0 %v1741
      %v1791 = vpop.xlane.xlu0 %1790
      %1792 = vadd.xlane.f32.xlu0 %v1742
      %v1793 = vpop.xlane.xlu0 %1792
      %1794 = vadd.xlane.f32.xlu0 %v1743
      %v1795 = vpop.xlane.xlu0 %1794
      %1796 = vadd.xlane.f32.xlu0 %v1744
      %v1797 = vpop.xlane.xlu0 %1796
      %1798 = vadd.xlane.f32.xlu0 %v1745
      %v1799 = vpop.xlane.xlu0 %1798
      %1800 = vadd.xlane.f32.xlu0 %v1746
      %v1801 = vpop.xlane.xlu0 %1800
      %1802 = vadd.xlane.f32.xlu0 %v1747
      %v1803 = vpop.xlane.xlu0 %1802
      %1804 = vadd.xlane.f32.xlu0 %v1748
      %v1805 = vpop.xlane.xlu0 %1804
      %1806 = vadd.xlane.f32.xlu0 %v1749
      %v1807 = vpop.xlane.xlu0 %1806
      %1808 = vadd.xlane.f32.xlu0 %v1750
      %v1809 = vpop.xlane.xlu0 %1808
      %1810 = vadd.xlane.f32.xlu0 %v1751
      %v1811 = vpop.xlane.xlu0 %1810
      %1812 = vadd.xlane.f32.xlu0 %v1752
      %v1813 = vpop.xlane.xlu0 %1812
      %1814 = vadd.xlane.f32.xlu0 %v1753
      %v1815 = vpop.xlane.xlu0 %1814
      %1816 = vadd.xlane.f32.xlu0 %v1754
      %v1817 = vpop.xlane.xlu0 %1816
      %1818 = vadd.xlane.f32.xlu0 %v1755
      %v1819 = vpop.xlane.xlu0 %1818
      %v1820 = vmul.f32 %v1757, 0.015625
      %v1821 = vmul.f32 %v1759, 0.015625
      %v1822 = vmul.f32 %v1761, 0.015625
      %v1823 = vmul.f32 %v1763, 0.015625
      %v1824 = vmul.f32 %v1765, 0.015625
      %v1825 = vmul.f32 %v1767, 0.015625
      %v1826 = vmul.f32 %v1769, 0.015625
      %v1827 = vmul.f32 %v1771, 0.015625
      %v1828 = vmul.f32 %v1773, 0.015625
      %v1829 = vmul.f32 %v1775, 0.015625
      %v1830 = vmul.f32 %v1777, 0.015625
      %v1831 = vmul.f32 %v1779, 0.015625
      %v1832 = vmul.f32 %v1781, 0.015625
      %v1833 = vmul.f32 %v1783, 0.015625
      %v1834 = vmul.f32 %v1785, 0.015625
      %v1835 = vmul.f32 %v1787, 0.015625
      %v1836 = vmul.f32 %v1789, 0.015625
      %v1837 = vmul.f32 %v1791, 0.015625
      %v1838 = vmul.f32 %v1793, 0.015625
      %v1839 = vmul.f32 %v1795, 0.015625
      %v1840 = vmul.f32 %v1797, 0.015625
      %v1841 = vmul.f32 %v1799, 0.015625
      %v1842 = vmul.f32 %v1801, 0.015625
      %v1843 = vmul.f32 %v1803, 0.015625
      %v1844 = vmul.f32 %v1805, 0.015625
      %v1845 = vmul.f32 %v1807, 0.015625
      %v1846 = vmul.f32 %v1809, 0.015625
      %v1847 = vmul.f32 %v1811, 0.015625
      %v1848 = vmul.f32 %v1813, 0.015625
      %v1849 = vmul.f32 %v1815, 0.015625
      %v1850 = vmul.f32 %v1817, 0.015625
      %v1851 = vmul.f32 %v1819, 0.015625
      %v1852 = vmul.f32 %v1724, %v1724
      %v1853 = vmul.f32 %v1725, %v1725
      %v1854 = vmul.f32 %v1726, %v1726
      %v1855 = vmul.f32 %v1727, %v1727
      %v1856 = vmul.f32 %v1728, %v1728
      %v1857 = vmul.f32 %v1729, %v1729
      %v1858 = vmul.f32 %v1730, %v1730
      %v1859 = vmul.f32 %v1731, %v1731
      %v1860 = vmul.f32 %v1732, %v1732
      %v1861 = vmul.f32 %v1733, %v1733
      %v1862 = vmul.f32 %v1734, %v1734
      %v1863 = vmul.f32 %v1735, %v1735
      %v1864 = vmul.f32 %v1736, %v1736
      %v1865 = vmul.f32 %v1737, %v1737
      %v1866 = vmul.f32 %v1738, %v1738
      %v1867 = vmul.f32 %v1739, %v1739
      %v1868 = vmul.f32 %v1740, %v1740
      %v1869 = vmul.f32 %v1741, %v1741
      %v1870 = vmul.f32 %v1742, %v1742
      %v1871 = vmul.f32 %v1743, %v1743
      %v1872 = vmul.f32 %v1744, %v1744
      %v1873 = vmul.f32 %v1745, %v1745
      %v1874 = vmul.f32 %v1746, %v1746
      %v1875 = vmul.f32 %v1747, %v1747
      %v1876 = vmul.f32 %v1748, %v1748
      %v1877 = vmul.f32 %v1749, %v1749
      %v1878 = vmul.f32 %v1750, %v1750
      %v1879 = vmul.f32 %v1751, %v1751
      %v1880 = vmul.f32 %v1752, %v1752
      %v1881 = vmul.f32 %v1753, %v1753
      %v1882 = vmul.f32 %v1754, %v1754
      %v1883 = vmul.f32 %v1755, %v1755
      %1884 = vadd.xlane.f32.xlu0 %v1852
      %v1885 = vpop.xlane.xlu0 %1884
      %1886 = vadd.xlane.f32.xlu0 %v1853
      %v1887 = vpop.xlane.xlu0 %1886
      %1888 = vadd.xlane.f32.xlu0 %v1854
      %v1889 = vpop.xlane.xlu0 %1888
      %1890 = vadd.xlane.f32.xlu0 %v1855
      %v1891 = vpop.xlane.xlu0 %1890
      %1892 = vadd.xlane.f32.xlu0 %v1856
      %v1893 = vpop.xlane.xlu0 %1892
      %1894 = vadd.xlane.f32.xlu0 %v1857
      %v1895 = vpop.xlane.xlu0 %1894
      %1896 = vadd.xlane.f32.xlu0 %v1858
      %v1897 = vpop.xlane.xlu0 %1896
      %1898 = vadd.xlane.f32.xlu0 %v1859
      %v1899 = vpop.xlane.xlu0 %1898
      %1900 = vadd.xlane.f32.xlu0 %v1860
      %v1901 = vpop.xlane.xlu0 %1900
      %1902 = vadd.xlane.f32.xlu0 %v1861
      %v1903 = vpop.xlane.xlu0 %1902
      %1904 = vadd.xlane.f32.xlu0 %v1862
      %v1905 = vpop.xlane.xlu0 %1904
      %1906 = vadd.xlane.f32.xlu0 %v1863
      %v1907 = vpop.xlane.xlu0 %1906
      %1908 = vadd.xlane.f32.xlu0 %v1864
      %v1909 = vpop.xlane.xlu0 %1908
      %1910 = vadd.xlane.f32.xlu0 %v1865
      %v1911 = vpop.xlane.xlu0 %1910
      %1912 = vadd.xlane.f32.xlu0 %v1866
      %v1913 = vpop.xlane.xlu0 %1912
      %1914 = vadd.xlane.f32.xlu0 %v1867
      %v1915 = vpop.xlane.xlu0 %1914
      %1916 = vadd.xlane.f32.xlu0 %v1868
      %v1917 = vpop.xlane.xlu0 %1916
      %1918 = vadd.xlane.f32.xlu0 %v1869
      %v1919 = vpop.xlane.xlu0 %1918
      %1920 = vadd.xlane.f32.xlu0 %v1870
      %v1921 = vpop.xlane.xlu0 %1920
      %1922 = vadd.xlane.f32.xlu0 %v1871
      %v1923 = vpop.xlane.xlu0 %1922
      %1924 = vadd.xlane.f32.xlu0 %v1872
      %v1925 = vpop.xlane.xlu0 %1924
      %1926 = vadd.xlane.f32.xlu0 %v1873
      %v1927 = vpop.xlane.xlu0 %1926
      %1928 = vadd.xlane.f32.xlu0 %v1874
      %v1929 = vpop.xlane.xlu0 %1928
      %1930 = vadd.xlane.f32.xlu0 %v1875
      %v1931 = vpop.xlane.xlu0 %1930
      %1932 = vadd.xlane.f32.xlu0 %v1876
      %v1933 = vpop.xlane.xlu0 %1932
      %1934 = vadd.xlane.f32.xlu0 %v1877
      %v1935 = vpop.xlane.xlu0 %1934
      %1936 = vadd.xlane.f32.xlu0 %v1878
      %v1937 = vpop.xlane.xlu0 %1936
      %1938 = vadd.xlane.f32.xlu0 %v1879
      %v1939 = vpop.xlane.xlu0 %1938
      %1940 = vadd.xlane.f32.xlu0 %v1880
      %v1941 = vpop.xlane.xlu0 %1940
      %1942 = vadd.xlane.f32.xlu0 %v1881
      %v1943 = vpop.xlane.xlu0 %1942
      %1944 = vadd.xlane.f32.xlu0 %v1882
      %v1945 = vpop.xlane.xlu0 %1944
      %1946 = vadd.xlane.f32.xlu0 %v1883
      %v1947 = vpop.xlane.xlu0 %1946
      %v1948 = vmul.f32 %v1885, 0.015625
      %v1949 = vmul.f32 %v1887, 0.015625
      %v1950 = vmul.f32 %v1889, 0.015625
      %v1951 = vmul.f32 %v1891, 0.015625
      %v1952 = vmul.f32 %v1893, 0.015625
      %v1953 = vmul.f32 %v1895, 0.015625
      %v1954 = vmul.f32 %v1897, 0.015625
      %v1955 = vmul.f32 %v1899, 0.015625
      %v1956 = vmul.f32 %v1901, 0.015625
      %v1957 = vmul.f32 %v1903, 0.015625
      %v1958 = vmul.f32 %v1905, 0.015625
      %v1959 = vmul.f32 %v1907, 0.015625
      %v1960 = vmul.f32 %v1909, 0.015625
      %v1961 = vmul.f32 %v1911, 0.015625
      %v1962 = vmul.f32 %v1913, 0.015625
      %v1963 = vmul.f32 %v1915, 0.015625
      %v1964 = vmul.f32 %v1917, 0.015625
      %v1965 = vmul.f32 %v1919, 0.015625
      %v1966 = vmul.f32 %v1921, 0.015625
      %v1967 = vmul.f32 %v1923, 0.015625
      %v1968 = vmul.f32 %v1925, 0.015625
      %v1969 = vmul.f32 %v1927, 0.015625
      %v1970 = vmul.f32 %v1929, 0.015625
      %v1971 = vmul.f32 %v1931, 0.015625
      %v1972 = vmul.f32 %v1933, 0.015625
      %v1973 = vmul.f32 %v1935, 0.015625
      %v1974 = vmul.f32 %v1937, 0.015625
      %v1975 = vmul.f32 %v1939, 0.015625
      %v1976 = vmul.f32 %v1941, 0.015625
      %v1977 = vmul.f32 %v1943, 0.015625
      %v1978 = vmul.f32 %v1945, 0.015625
      %v1979 = vmul.f32 %v1947, 0.015625
      %v1980 = vmul.f32 %v1820, %v1820
      %v1981 = vmul.f32 %v1821, %v1821
      %v1982 = vmul.f32 %v1822, %v1822
      %v1983 = vmul.f32 %v1823, %v1823
      %v1984 = vmul.f32 %v1824, %v1824
      %v1985 = vmul.f32 %v1825, %v1825
      %v1986 = vmul.f32 %v1826, %v1826
      %v1987 = vmul.f32 %v1827, %v1827
      %v1988 = vmul.f32 %v1828, %v1828
      %v1989 = vmul.f32 %v1829, %v1829
      %v1990 = vmul.f32 %v1830, %v1830
      %v1991 = vmul.f32 %v1831, %v1831
      %v1992 = vmul.f32 %v1832, %v1832
      %v1993 = vmul.f32 %v1833, %v1833
      %v1994 = vmul.f32 %v1834, %v1834
      %v1995 = vmul.f32 %v1835, %v1835
      %v1996 = vmul.f32 %v1836, %v1836
      %v1997 = vmul.f32 %v1837, %v1837
      %v1998 = vmul.f32 %v1838, %v1838
      %v1999 = vmul.f32 %v1839, %v1839
      %v2000 = vmul.f32 %v1840, %v1840
      %v2001 = vmul.f32 %v1841, %v1841
      %v2002 = vmul.f32 %v1842, %v1842
      %v2003 = vmul.f32 %v1843, %v1843
      %v2004 = vmul.f32 %v1844, %v1844
      %v2005 = vmul.f32 %v1845, %v1845
      %v2006 = vmul.f32 %v1846, %v1846
      %v2007 = vmul.f32 %v1847, %v1847
      %v2008 = vmul.f32 %v1848, %v1848
      %v2009 = vmul.f32 %v1849, %v1849
      %v2010 = vmul.f32 %v1850, %v1850
      %v2011 = vmul.f32 %v1851, %v1851
      %v2012 = vsub.f32 %v1948, %v1980
      %v2013 = vsub.f32 %v1949, %v1981
      %v2014 = vsub.f32 %v1950, %v1982
      %v2015 = vsub.f32 %v1951, %v1983
      %v2016 = vsub.f32 %v1952, %v1984
      %v2017 = vsub.f32 %v1953, %v1985
      %v2018 = vsub.f32 %v1954, %v1986
      %v2019 = vsub.f32 %v1955, %v1987
      %v2020 = vsub.f32 %v1956, %v1988
      %v2021 = vsub.f32 %v1957, %v1989
      %v2022 = vsub.f32 %v1958, %v1990
      %v2023 = vsub.f32 %v1959, %v1991
      %v2024 = vsub.f32 %v1960, %v1992
      %v2025 = vsub.f32 %v1961, %v1993
      %v2026 = vsub.f32 %v1962, %v1994
      %v2027 = vsub.f32 %v1963, %v1995
      %v2028 = vsub.f32 %v1964, %v1996
      %v2029 = vsub.f32 %v1965, %v1997
      %v2030 = vsub.f32 %v1966, %v1998
      %v2031 = vsub.f32 %v1967, %v1999
      %v2032 = vsub.f32 %v1968, %v2000
      %v2033 = vsub.f32 %v1969, %v2001
      %v2034 = vsub.f32 %v1970, %v2002
      %v2035 = vsub.f32 %v1971, %v2003
      %v2036 = vsub.f32 %v1972, %v2004
      %v2037 = vsub.f32 %v1973, %v2005
      %v2038 = vsub.f32 %v1974, %v2006
      %v2039 = vsub.f32 %v1975, %v2007
      %v2040 = vsub.f32 %v1976, %v2008
      %v2041 = vsub.f32 %v1977, %v2009
      %v2042 = vsub.f32 %v1978, %v2010
      %v2043 = vsub.f32 %v1979, %v2011
      %v2044 = vsub.f32 %v1724, %v1820
      %v2045 = vsub.f32 %v1725, %v1821
      %v2046 = vsub.f32 %v1726, %v1822
      %v2047 = vsub.f32 %v1727, %v1823
      %v2048 = vsub.f32 %v1728, %v1824
      %v2049 = vsub.f32 %v1729, %v1825
      %v2050 = vsub.f32 %v1730, %v1826
      %v2051 = vsub.f32 %v1731, %v1827
      %v2052 = vsub.f32 %v1732, %v1828
      %v2053 = vsub.f32 %v1733, %v1829
      %v2054 = vsub.f32 %v1734, %v1830
      %v2055 = vsub.f32 %v1735, %v1831
      %v2056 = vsub.f32 %v1736, %v1832
      %v2057 = vsub.f32 %v1737, %v1833
      %v2058 = vsub.f32 %v1738, %v1834
      %v2059 = vsub.f32 %v1739, %v1835
      %v2060 = vsub.f32 %v1740, %v1836
      %v2061 = vsub.f32 %v1741, %v1837
      %v2062 = vsub.f32 %v1742, %v1838
      %v2063 = vsub.f32 %v1743, %v1839
      %v2064 = vsub.f32 %v1744, %v1840
      %v2065 = vsub.f32 %v1745, %v1841
      %v2066 = vsub.f32 %v1746, %v1842
      %v2067 = vsub.f32 %v1747, %v1843
      %v2068 = vsub.f32 %v1748, %v1844
      %v2069 = vsub.f32 %v1749, %v1845
      %v2070 = vsub.f32 %v1750, %v1846
      %v2071 = vsub.f32 %v1751, %v1847
      %v2072 = vsub.f32 %v1752, %v1848
      %v2073 = vsub.f32 %v1753, %v1849
      %v2074 = vsub.f32 %v1754, %v1850
      %v2075 = vsub.f32 %v1755, %v1851
      %v2076 = vadd.f32 %v2012, 1e-05
      %v2077 = vadd.f32 %v2013, 1e-05
      %v2078 = vadd.f32 %v2014, 1e-05
      %v2079 = vadd.f32 %v2015, 1e-05
      %v2080 = vadd.f32 %v2016, 1e-05
      %v2081 = vadd.f32 %v2017, 1e-05
      %v2082 = vadd.f32 %v2018, 1e-05
      %v2083 = vadd.f32 %v2019, 1e-05
      %v2084 = vadd.f32 %v2020, 1e-05
      %v2085 = vadd.f32 %v2021, 1e-05
      %v2086 = vadd.f32 %v2022, 1e-05
      %v2087 = vadd.f32 %v2023, 1e-05
      %v2088 = vadd.f32 %v2024, 1e-05
      %v2089 = vadd.f32 %v2025, 1e-05
      %v2090 = vadd.f32 %v2026, 1e-05
      %v2091 = vadd.f32 %v2027, 1e-05
      %v2092 = vadd.f32 %v2028, 1e-05
      %v2093 = vadd.f32 %v2029, 1e-05
      %v2094 = vadd.f32 %v2030, 1e-05
      %v2095 = vadd.f32 %v2031, 1e-05
      %v2096 = vadd.f32 %v2032, 1e-05
      %v2097 = vadd.f32 %v2033, 1e-05
      %v2098 = vadd.f32 %v2034, 1e-05
      %v2099 = vadd.f32 %v2035, 1e-05
      %v2100 = vadd.f32 %v2036, 1e-05
      %v2101 = vadd.f32 %v2037, 1e-05
      %v2102 = vadd.f32 %v2038, 1e-05
      %v2103 = vadd.f32 %v2039, 1e-05
      %v2104 = vadd.f32 %v2040, 1e-05
      %v2105 = vadd.f32 %v2041, 1e-05
      %v2106 = vadd.f32 %v2042, 1e-05
      %v2107 = vadd.f32 %v2043, 1e-05
      %v2108 = vrsqrt.pop %v2076
      %v2109 = vrsqrt.pop %v2077
      %v2110 = vrsqrt.pop %v2078
      %v2111 = vrsqrt.pop %v2079
      %v2112 = vrsqrt.pop %v2080
      %v2113 = vrsqrt.pop %v2081
      %v2114 = vrsqrt.pop %v2082
      %v2115 = vrsqrt.pop %v2083
      %v2116 = vrsqrt.pop %v2084
      %v2117 = vrsqrt.pop %v2085
      %v2118 = vrsqrt.pop %v2086
      %v2119 = vrsqrt.pop %v2087
      %v2120 = vrsqrt.pop %v2088
      %v2121 = vrsqrt.pop %v2089
      %v2122 = vrsqrt.pop %v2090
      %v2123 = vrsqrt.pop %v2091
      %v2124 = vrsqrt.pop %v2092
      %v2125 = vrsqrt.pop %v2093
      %v2126 = vrsqrt.pop %v2094
      %v2127 = vrsqrt.pop %v2095
      %v2128 = vrsqrt.pop %v2096
      %v2129 = vrsqrt.pop %v2097
      %v2130 = vrsqrt.pop %v2098
      %v2131 = vrsqrt.pop %v2099
      %v2132 = vrsqrt.pop %v2100
      %v2133 = vrsqrt.pop %v2101
      %v2134 = vrsqrt.pop %v2102
      %v2135 = vrsqrt.pop %v2103
      %v2136 = vrsqrt.pop %v2104
      %v2137 = vrsqrt.pop %v2105
      %v2138 = vrsqrt.pop %v2106
      %v2139 = vrsqrt.pop %v2107
      %v2140 = vmul.f32 %v2044, %v2108
      %v2141 = vmul.f32 %v2045, %v2109
      %v2142 = vmul.f32 %v2046, %v2110
      %v2143 = vmul.f32 %v2047, %v2111
      %v2144 = vmul.f32 %v2048, %v2112
      %v2145 = vmul.f32 %v2049, %v2113
      %v2146 = vmul.f32 %v2050, %v2114
      %v2147 = vmul.f32 %v2051, %v2115
      %v2148 = vmul.f32 %v2052, %v2116
      %v2149 = vmul.f32 %v2053, %v2117
      %v2150 = vmul.f32 %v2054, %v2118
      %v2151 = vmul.f32 %v2055, %v2119
      %v2152 = vmul.f32 %v2056, %v2120
      %v2153 = vmul.f32 %v2057, %v2121
      %v2154 = vmul.f32 %v2058, %v2122
      %v2155 = vmul.f32 %v2059, %v2123
      %v2156 = vmul.f32 %v2060, %v2124
      %v2157 = vmul.f32 %v2061, %v2125
      %v2158 = vmul.f32 %v2062, %v2126
      %v2159 = vmul.f32 %v2063, %v2127
      %v2160 = vmul.f32 %v2064, %v2128
      %v2161 = vmul.f32 %v2065, %v2129
      %v2162 = vmul.f32 %v2066, %v2130
      %v2163 = vmul.f32 %v2067, %v2131
      %v2164 = vmul.f32 %v2068, %v2132
      %v2165 = vmul.f32 %v2069, %v2133
      %v2166 = vmul.f32 %v2070, %v2134
      %v2167 = vmul.f32 %v2071, %v2135
      %v2168 = vmul.f32 %v2072, %v2136
      %v2169 = vmul.f32 %v2073, %v2137
      %v2170 = vmul.f32 %v2074, %v2138
      %v2171 = vmul.f32 %v2075, %v2139
      %v2172 = vpack.c.bf16 %v2141, %v2140
      %v2173 = vpack.c.bf16 %v2143, %v2142
      %v2174 = vpack.c.bf16 %v2145, %v2144
      %v2175 = vpack.c.bf16 %v2147, %v2146
      %v2176 = vpack.c.bf16 %v2149, %v2148
      %v2177 = vpack.c.bf16 %v2151, %v2150
      %v2178 = vpack.c.bf16 %v2153, %v2152
      %v2179 = vpack.c.bf16 %v2155, %v2154
      %v2180 = vpack.c.bf16 %v2157, %v2156
      %v2181 = vpack.c.bf16 %v2159, %v2158
      %v2182 = vpack.c.bf16 %v2161, %v2160
      %v2183 = vpack.c.bf16 %v2163, %v2162
      %v2184 = vpack.c.bf16 %v2165, %v2164
      %v2185 = vpack.c.bf16 %v2167, %v2166
      %v2186 = vpack.c.bf16 %v2169, %v2168
      %v2187 = vpack.c.bf16 %v2171, %v2170
      %v2188 = vld [vmem:[%s4] sm:$0xf]
      %v2189 = vld [vmem:[%s4 + $0x4] sm:$0xf]
      %v2190 = vld [vmem:[%s4 + $0x8] sm:$0xf]
      %v2191 = vld [vmem:[%s4 + $0xc] sm:$0xf]
      %v2192 = vld [vmem:[%s4 + $0x10] sm:$0xf]
      %v2193 = vld [vmem:[%s4 + $0x14] sm:$0xf]
      %v2194 = vld [vmem:[%s4 + $0x18] sm:$0xf]
      %v2195 = vld [vmem:[%s4 + $0x1c] sm:$0xf]
      %v2196 = vld [vmem:[%s4 + $0x20] sm:$0xf]
      %v2197 = vld [vmem:[%s4 + $0x24] sm:$0xf]
      %v2198 = vld [vmem:[%s4 + $0x28] sm:$0xf]
      %v2199 = vld [vmem:[%s4 + $0x2c] sm:$0xf]
      %v2200 = vld [vmem:[%s4 + $0x30] sm:$0xf]
      %v2201 = vld [vmem:[%s4 + $0x34] sm:$0xf]
      %v2202 = vld [vmem:[%s4 + $0x38] sm:$0xf]
      %v2203 = vld [vmem:[%s4 + $0x3c] sm:$0xf]
      %v2204 = vld [vmem:[%s5] sm:$0x1]
      %v2206 = vlaneseq
      %v2207 = vshrl.u32 %v2206, 7
      %v2208 = vsub.s32 0, %v2207
      %v2209 = vrot.slane %v2204, %v2208
      %v2227 = vunpack.c.l.b16 %v2188
      %v2228 = vunpack.c.l.b16 %v2189
      %v2229 = vunpack.c.l.b16 %v2190
      %v2230 = vunpack.c.l.b16 %v2191
      %v2231 = vunpack.c.l.b16 %v2192
      %v2232 = vunpack.c.l.b16 %v2193
      %v2233 = vunpack.c.l.b16 %v2194
      %v2234 = vunpack.c.l.b16 %v2195
      %v2235 = vunpack.c.l.b16 %v2196
      %v2236 = vunpack.c.l.b16 %v2197
      %v2237 = vunpack.c.l.b16 %v2198
      %v2238 = vunpack.c.l.b16 %v2199
      %v2239 = vunpack.c.l.b16 %v2200
      %v2240 = vunpack.c.l.b16 %v2201
      %v2241 = vunpack.c.l.b16 %v2202
      %v2242 = vunpack.c.l.b16 %v2203
      %v2243 = vpack.c.b16 %v2228, %v2227
      %v2244 = vpack.c.b16 %v2230, %v2229
      %v2245 = vpack.c.b16 %v2232, %v2231
      %v2246 = vpack.c.b16 %v2234, %v2233
      %v2247 = vpack.c.b16 %v2236, %v2235
      %v2248 = vpack.c.b16 %v2238, %v2237
      %v2249 = vpack.c.b16 %v2240, %v2239
      %v2250 = vpack.c.b16 %v2242, %v2241
      %2259 = vmatprep.subr.bf16.mxu0 0
      %2260 = vmatpush1.bf16.msra.mxu0 %v2243
      %2261 = vmatprep.subr.bf16.mxu0 0
      %2262 = vmatpush1.bf16.msra.mxu0 %v2244
      %2263 = vmatprep.subr.bf16.mxu0 0
      %2264 = vmatpush1.bf16.msra.mxu0 %v2245
      %2265 = vmatprep.subr.bf16.mxu0 0
      %2266 = vmatpush1.bf16.msra.mxu0 %v2246
      %2267 = vmatprep.subr.bf16.mxu0 0
      %2268 = vmatpush1.bf16.msra.mxu0 %v2247
      %2269 = vmatprep.subr.bf16.mxu0 0
      %2270 = vmatpush1.bf16.msra.mxu0 %v2248
      %2271 = vmatprep.subr.bf16.mxu0 0
      %2272 = vmatpush1.bf16.msra.mxu0 %v2249
      %2273 = vmatprep.subr.bf16.mxu0 0
      %2274 = vmatpush1.bf16.msra.mxu0 %v2250
      %2275 = vmatprep.subr.bf16.mxu0 0
      %2276 = vmatpush1.bf16.msra.mxu0 0
      %2277 = vmatprep.subr.bf16.mxu0 0
      %2278 = vmatpush1.bf16.msra.mxu0 0
      %2279 = vmatprep.subr.bf16.mxu0 0
      %2280 = vmatpush1.bf16.msra.mxu0 0
      %2281 = vmatprep.subr.bf16.mxu0 0
      %2282 = vmatpush1.bf16.msra.mxu0 0
      %2283 = vmatprep.subr.bf16.mxu0 0
      %2284 = vmatpush1.bf16.msra.mxu0 0
      %2285 = vmatprep.subr.bf16.mxu0 0
      %2286 = vmatpush1.bf16.msra.mxu0 0
      %2287 = vmatprep.subr.bf16.mxu0 0
      %2288 = vmatpush1.bf16.msra.mxu0 0
      %2289 = vmatprep.subr.bf16.mxu0 0
      %2290 = vmatpush1.bf16.msra.mxu0 0
      %2291 = vmatprep.mubr.bf16.mxu0 0
      %2292 = vmatmul.mubr.bf16.gmra.mrb[0].mxu0 %v2172
      %v2293 = vpop.f32.mrb[0].mxu0
      %v2294 = vadd.f32 %v2209, %v2293
      %v2295 = vpop.f32.mrb[0].mxu0
      %v2296 = vpop.f32.mrb[0].mxu0
      %v2297 = vadd.f32 %v2209, %v2296
      %v2298 = vpop.f32.mrb[0].mxu0
      %2299 = vmatprep.mubr.bf16.mxu0 0
      %2300 = vmatmul.mubr.bf16.gmra.mrb[0].mxu0 %v2173
      %v2301 = vpop.f32.mrb[0].mxu0
      %v2302 = vadd.f32 %v2209, %v2301
      %v2303 = vpop.f32.mrb[0].mxu0
      %v2304 = vpop.f32.mrb[0].mxu0
      %v2305 = vadd.f32 %v2209, %v2304
      %v2306 = vpop.f32.mrb[0].mxu0
      %2307 = vmatprep.mubr.bf16.mxu0 0
      %2308 = vmatmul.mubr.bf16.gmra.mrb[0].mxu0 %v2174
      %v2309 = vpop.f32.mrb[0].mxu0
      %v2310 = vadd.f32 %v2209, %v2309
      %v2311 = vpop.f32.mrb[0].mxu0
      %v2312 = vpop.f32.mrb[0].mxu0
      %v2313 = vadd.f32 %v2209, %v2312
      %v2314 = vpop.f32.mrb[0].mxu0
      %2315 = vmatprep.mubr.bf16.mxu0 0
      %2316 = vmatmul.mubr.bf16.gmra.mrb[0].mxu0 %v2175
      %v2317 = vpop.f32.mrb[0].mxu0
      %v2318 = vadd.f32 %v2209, %v2317
      %v2319 = vpop.f32.mrb[0].mxu0
      %v2320 = vpop.f32.mrb[0].mxu0
      %v2321 = vadd.f32 %v2209, %v2320
      %v2322 = vpop.f32.mrb[0].mxu0
      %2323 = vmatprep.mubr.bf16.mxu0 0
      %2324 = vmatmul.mubr.bf16.gmra.mrb[0].mxu0 %v2176
      %v2325 = vpop.f32.mrb[0].mxu0
      %v2326 = vadd.f32 %v2209, %v2325
      %v2327 = vpop.f32.mrb[0].mxu0
      %v2328 = vpop.f32.mrb[0].mxu0
      %v2329 = vadd.f32 %v2209, %v2328
      %v2330 = vpop.f32.mrb[0].mxu0
      %2331 = vmatprep.mubr.bf16.mxu0 0
      %2332 = vmatmul.mubr.bf16.gmra.mrb[0].mxu0 %v2177
      %v2333 = vpop.f32.mrb[0].mxu0
      %v2334 = vadd.f32 %v2209, %v2333
      %v2335 = vpop.f32.mrb[0].mxu0
      %v2336 = vpop.f32.mrb[0].mxu0
      %v2337 = vadd.f32 %v2209, %v2336
      %v2338 = vpop.f32.mrb[0].mxu0
      %2339 = vmatprep.mubr.bf16.mxu0 0
      %2340 = vmatmul.mubr.bf16.gmra.mrb[0].mxu0 %v2178
      %v2341 = vpop.f32.mrb[0].mxu0
      %v2342 = vadd.f32 %v2209, %v2341
      %v2343 = vpop.f32.mrb[0].mxu0
      %v2344 = vpop.f32.mrb[0].mxu0
      %v2345 = vadd.f32 %v2209, %v2344
      %v2346 = vpop.f32.mrb[0].mxu0
      %2347 = vmatprep.mubr.bf16.mxu0 0
      %2348 = vmatmul.mubr.bf16.gmra.mrb[0].mxu0 %v2179
      %v2349 = vpop.f32.mrb[0].mxu0
      %v2350 = vadd.f32 %v2209, %v2349
      %v2351 = vpop.f32.mrb[0].mxu0
      %v2352 = vpop.f32.mrb[0].mxu0
      %v2353 = vadd.f32 %v2209, %v2352
      %v2354 = vpop.f32.mrb[0].mxu0
      %2355 = vmatprep.mubr.bf16.mxu0 0
      %2356 = vmatmul.mubr.bf16.gmra.mrb[0].mxu0 %v2180
      %v2357 = vpop.f32.mrb[0].mxu0
      %v2358 = vadd.f32 %v2209, %v2357
      %v2359 = vpop.f32.mrb[0].mxu0
      %v2360 = vpop.f32.mrb[0].mxu0
      %v2361 = vadd.f32 %v2209, %v2360
      %v2362 = vpop.f32.mrb[0].mxu0
      %2363 = vmatprep.mubr.bf16.mxu0 0
      %2364 = vmatmul.mubr.bf16.gmra.mrb[0].mxu0 %v2181
      %v2365 = vpop.f32.mrb[0].mxu0
      %v2366 = vadd.f32 %v2209, %v2365
      %v2367 = vpop.f32.mrb[0].mxu0
      %v2368 = vpop.f32.mrb[0].mxu0
      %v2369 = vadd.f32 %v2209, %v2368
      %v2370 = vpop.f32.mrb[0].mxu0
      %2371 = vmatprep.mubr.bf16.mxu0 0
      %2372 = vmatmul.mubr.bf16.gmra.mrb[0].mxu0 %v2182
      %v2373 = vpop.f32.mrb[0].mxu0
      %v2374 = vadd.f32 %v2209, %v2373
      %v2375 = vpop.f32.mrb[0].mxu0
      %v2376 = vpop.f32.mrb[0].mxu0
      %v2377 = vadd.f32 %v2209, %v2376
      %v2378 = vpop.f32.mrb[0].mxu0
      %2379 = vmatprep.mubr.bf16.mxu0 0
      %2380 = vmatmul.mubr.bf16.gmra.mrb[0].mxu0 %v2183
      %v2381 = vpop.f32.mrb[0].mxu0
      %v2382 = vadd.f32 %v2209, %v2381
      %v2383 = vpop.f32.mrb[0].mxu0
      %v2384 = vpop.f32.mrb[0].mxu0
      %v2385 = vadd.f32 %v2209, %v2384
      %v2386 = vpop.f32.mrb[0].mxu0
      %2387 = vmatprep.mubr.bf16.mxu0 0
      %2388 = vmatmul.mubr.bf16.gmra.mrb[0].mxu0 %v2184
      %v2389 = vpop.f32.mrb[0].mxu0
      %v2390 = vadd.f32 %v2209, %v2389
      %v2391 = vpop.f32.mrb[0].mxu0
      %v2392 = vpop.f32.mrb[0].mxu0
      %v2393 = vadd.f32 %v2209, %v2392
      %v2394 = vpop.f32.mrb[0].mxu0
      %2395 = vmatprep.mubr.bf16.mxu0 0
      %2396 = vmatmul.mubr.bf16.gmra.mrb[0].mxu0 %v2185
      %v2397 = vpop.f32.mrb[0].mxu0
      %v2398 = vadd.f32 %v2209, %v2397
      %v2399 = vpop.f32.mrb[0].mxu0
      %v2400 = vpop.f32.mrb[0].mxu0
      %v2401 = vadd.f32 %v2209, %v2400
      %v2402 = vpop.f32.mrb[0].mxu0
      %2403 = vmatprep.mubr.bf16.mxu0 0
      %2404 = vmatmul.mubr.bf16.gmra.mrb[0].mxu0 %v2186
      %v2405 = vpop.f32.mrb[0].mxu0
      %v2406 = vadd.f32 %v2209, %v2405
      %v2407 = vpop.f32.mrb[0].mxu0
      %v2408 = vpop.f32.mrb[0].mxu0
      %v2409 = vadd.f32 %v2209, %v2408
      %v2410 = vpop.f32.mrb[0].mxu0
      %2411 = vmatprep.mubr.bf16.mxu0 0
      %2412 = vmatmul.mubr.bf16.gmra.mrb[0].mxu0 %v2187
      %v2413 = vpop.f32.mrb[0].mxu0
      %v2414 = vadd.f32 %v2209, %v2413
      %v2415 = vpop.f32.mrb[0].mxu0
      %v2416 = vpop.f32.mrb[0].mxu0
      %v2417 = vadd.f32 %v2209, %v2416
      %v2418 = vpop.f32.mrb[0].mxu0
      %2419 = vdwg.mxu0
      %vm2420 = vcmp.ge.f32.partialorder %v2294, 0.0
      %vm2421 = vcmp.ge.f32.partialorder %v2297, 0.0
      %vm2422 = vcmp.ge.f32.partialorder %v2302, 0.0
      %vm2423 = vcmp.ge.f32.partialorder %v2305, 0.0
      %vm2424 = vcmp.ge.f32.partialorder %v2310, 0.0
      %vm2425 = vcmp.ge.f32.partialorder %v2313, 0.0
      %vm2426 = vcmp.ge.f32.partialorder %v2318, 0.0
      %vm2427 = vcmp.ge.f32.partialorder %v2321, 0.0
      %vm2428 = vcmp.ge.f32.partialorder %v2326, 0.0
      %vm2429 = vcmp.ge.f32.partialorder %v2329, 0.0
      %vm2430 = vcmp.ge.f32.partialorder %v2334, 0.0
      %vm2431 = vcmp.ge.f32.partialorder %v2337, 0.0
      %vm2432 = vcmp.ge.f32.partialorder %v2342, 0.0
      %vm2433 = vcmp.ge.f32.partialorder %v2345, 0.0
      %vm2434 = vcmp.ge.f32.partialorder %v2350, 0.0
      %vm2435 = vcmp.ge.f32.partialorder %v2353, 0.0
      %vm2436 = vcmp.ge.f32.partialorder %v2358, 0.0
      %vm2437 = vcmp.ge.f32.partialorder %v2361, 0.0
      %vm2438 = vcmp.ge.f32.partialorder %v2366, 0.0
      %vm2439 = vcmp.ge.f32.partialorder %v2369, 0.0
      %vm2440 = vcmp.ge.f32.partialorder %v2374, 0.0
      %vm2441 = vcmp.ge.f32.partialorder %v2377, 0.0
      %vm2442 = vcmp.ge.f32.partialorder %v2382, 0.0
      %vm2443 = vcmp.ge.f32.partialorder %v2385, 0.0
      %vm2444 = vcmp.ge.f32.partialorder %v2390, 0.0
      %vm2445 = vcmp.ge.f32.partialorder %v2393, 0.0
      %vm2446 = vcmp.ge.f32.partialorder %v2398, 0.0
      %vm2447 = vcmp.ge.f32.partialorder %v2401, 0.0
      %vm2448 = vcmp.ge.f32.partialorder %v2406, 0.0
      %vm2449 = vcmp.ge.f32.partialorder %v2409, 0.0
      %vm2450 = vcmp.ge.f32.partialorder %v2414, 0.0
      %vm2451 = vcmp.ge.f32.partialorder %v2417, 0.0
      %v2452 = vmul.f32 %v2294, 0.01
      %v2453 = vmul.f32 %v2297, 0.01
      %v2454 = vmul.f32 %v2302, 0.01
      %v2455 = vmul.f32 %v2305, 0.01
      %v2456 = vmul.f32 %v2310, 0.01
      %v2457 = vmul.f32 %v2313, 0.01
      %v2458 = vmul.f32 %v2318, 0.01
      %v2459 = vmul.f32 %v2321, 0.01
      %v2460 = vmul.f32 %v2326, 0.01
      %v2461 = vmul.f32 %v2329, 0.01
      %v2462 = vmul.f32 %v2334, 0.01
      %v2463 = vmul.f32 %v2337, 0.01
      %v2464 = vmul.f32 %v2342, 0.01
      %v2465 = vmul.f32 %v2345, 0.01
      %v2466 = vmul.f32 %v2350, 0.01
      %v2467 = vmul.f32 %v2353, 0.01
      %v2468 = vmul.f32 %v2358, 0.01
      %v2469 = vmul.f32 %v2361, 0.01
      %v2470 = vmul.f32 %v2366, 0.01
      %v2471 = vmul.f32 %v2369, 0.01
      %v2472 = vmul.f32 %v2374, 0.01
      %v2473 = vmul.f32 %v2377, 0.01
      %v2474 = vmul.f32 %v2382, 0.01
      %v2475 = vmul.f32 %v2385, 0.01
      %v2476 = vmul.f32 %v2390, 0.01
      %v2477 = vmul.f32 %v2393, 0.01
      %v2478 = vmul.f32 %v2398, 0.01
      %v2479 = vmul.f32 %v2401, 0.01
      %v2480 = vmul.f32 %v2406, 0.01
      %v2481 = vmul.f32 %v2409, 0.01
      %v2482 = vmul.f32 %v2414, 0.01
      %v2483 = vmul.f32 %v2417, 0.01
      %v2484 = vsel %vm2420, %v2294, %v2452
      %v2485 = vsel %vm2421, %v2297, %v2453
      %v2486 = vsel %vm2422, %v2302, %v2454
      %v2487 = vsel %vm2423, %v2305, %v2455
      %v2488 = vsel %vm2424, %v2310, %v2456
      %v2489 = vsel %vm2425, %v2313, %v2457
      %v2490 = vsel %vm2426, %v2318, %v2458
      %v2491 = vsel %vm2427, %v2321, %v2459
      %v2492 = vsel %vm2428, %v2326, %v2460
      %v2493 = vsel %vm2429, %v2329, %v2461
      %v2494 = vsel %vm2430, %v2334, %v2462
      %v2495 = vsel %vm2431, %v2337, %v2463
      %v2496 = vsel %vm2432, %v2342, %v2464
      %v2497 = vsel %vm2433, %v2345, %v2465
      %v2498 = vsel %vm2434, %v2350, %v2466
      %v2499 = vsel %vm2435, %v2353, %v2467
      %v2500 = vsel %vm2436, %v2358, %v2468
      %v2501 = vsel %vm2437, %v2361, %v2469
      %v2502 = vsel %vm2438, %v2366, %v2470
      %v2503 = vsel %vm2439, %v2369, %v2471
      %v2504 = vsel %vm2440, %v2374, %v2472
      %v2505 = vsel %vm2441, %v2377, %v2473
      %v2506 = vsel %vm2442, %v2382, %v2474
      %v2507 = vsel %vm2443, %v2385, %v2475
      %v2508 = vsel %vm2444, %v2390, %v2476
      %v2509 = vsel %vm2445, %v2393, %v2477
      %v2510 = vsel %vm2446, %v2398, %v2478
      %v2511 = vsel %vm2447, %v2401, %v2479
      %v2512 = vsel %vm2448, %v2406, %v2480
      %v2513 = vsel %vm2449, %v2409, %v2481
      %v2514 = vsel %vm2450, %v2414, %v2482
      %v2515 = vsel %vm2451, %v2417, %v2483
      %v2516 = vpack.c.bf16 %v2485, %v2484
      %v2517 = vpack.c.bf16 %v2487, %v2486
      %v2518 = vpack.c.bf16 %v2489, %v2488
      %v2519 = vpack.c.bf16 %v2491, %v2490
      %v2520 = vpack.c.bf16 %v2493, %v2492
      %v2521 = vpack.c.bf16 %v2495, %v2494
      %v2522 = vpack.c.bf16 %v2497, %v2496
      %v2523 = vpack.c.bf16 %v2499, %v2498
      %v2524 = vpack.c.bf16 %v2501, %v2500
      %v2525 = vpack.c.bf16 %v2503, %v2502
      %v2526 = vpack.c.bf16 %v2505, %v2504
      %v2527 = vpack.c.bf16 %v2507, %v2506
      %v2528 = vpack.c.bf16 %v2509, %v2508
      %v2529 = vpack.c.bf16 %v2511, %v2510
      %v2530 = vpack.c.bf16 %v2513, %v2512
      %v2531 = vpack.c.bf16 %v2515, %v2514
      %v2532 = vld [vmem:[%s6] sm:$0xf]
      %v2533 = vld [vmem:[%s6 + $0x4] sm:$0xf]
      %v2534 = vld [vmem:[%s6 + $0x8] sm:$0xf]
      %v2535 = vld [vmem:[%s6 + $0xc] sm:$0xf]
      %v2536 = vld [vmem:[%s6 + $0x10] sm:$0xf]
      %v2537 = vld [vmem:[%s6 + $0x14] sm:$0xf]
      %v2538 = vld [vmem:[%s6 + $0x18] sm:$0xf]
      %v2539 = vld [vmem:[%s6 + $0x1c] sm:$0xf]
      %v2540 = vld [vmem:[%s6 + $0x20] sm:$0xf]
      %v2541 = vld [vmem:[%s6 + $0x24] sm:$0xf]
      %v2542 = vld [vmem:[%s6 + $0x28] sm:$0xf]
      %v2543 = vld [vmem:[%s6 + $0x2c] sm:$0xf]
      %v2544 = vld [vmem:[%s6 + $0x30] sm:$0xf]
      %v2545 = vld [vmem:[%s6 + $0x34] sm:$0xf]
      %v2546 = vld [vmem:[%s6 + $0x38] sm:$0xf]
      %v2547 = vld [vmem:[%s6 + $0x3c] sm:$0xf]
      %v2548 = vld [vmem:[%s7] sm:$0x1]
      %v2550 = vlaneseq
      %v2551 = vshrl.u32 %v2550, 7
      %v2552 = vsub.s32 0, %v2551
      %v2553 = vrot.slane %v2548, %v2552
      %v2571 = vunpack.c.l.b16 %v2532
      %v2572 = vunpack.c.l.b16 %v2533
      %v2573 = vunpack.c.l.b16 %v2534
      %v2574 = vunpack.c.l.b16 %v2535
      %v2575 = vunpack.c.l.b16 %v2536
      %v2576 = vunpack.c.l.b16 %v2537
      %v2577 = vunpack.c.l.b16 %v2538
      %v2578 = vunpack.c.l.b16 %v2539
      %v2579 = vunpack.c.l.b16 %v2540
      %v2580 = vunpack.c.l.b16 %v2541
      %v2581 = vunpack.c.l.b16 %v2542
      %v2582 = vunpack.c.l.b16 %v2543
      %v2583 = vunpack.c.l.b16 %v2544
      %v2584 = vunpack.c.l.b16 %v2545
      %v2585 = vunpack.c.l.b16 %v2546
      %v2586 = vunpack.c.l.b16 %v2547
      %v2587 = vpack.c.b16 %v2572, %v2571
      %v2588 = vpack.c.b16 %v2574, %v2573
      %v2589 = vpack.c.b16 %v2576, %v2575
      %v2590 = vpack.c.b16 %v2578, %v2577
      %v2591 = vpack.c.b16 %v2580, %v2579
      %v2592 = vpack.c.b16 %v2582, %v2581
      %v2593 = vpack.c.b16 %v2584, %v2583
      %v2594 = vpack.c.b16 %v2586, %v2585
      %2603 = vmatprep.subr.bf16.mxu0 0
      %2604 = vmatpush1.bf16.msra.mxu0 %v2587
      %2605 = vmatprep.subr.bf16.mxu0 0
      %2606 = vmatpush1.bf16.msra.mxu0 %v2588
      %2607 = vmatprep.subr.bf16.mxu0 0
      %2608 = vmatpush1.bf16.msra.mxu0 %v2589
      %2609 = vmatprep.subr.bf16.mxu0 0
      %2610 = vmatpush1.bf16.msra.mxu0 %v2590
      %2611 = vmatprep.subr.bf16.mxu0 0
      %2612 = vmatpush1.bf16.msra.mxu0 %v2591
      %2613 = vmatprep.subr.bf16.mxu0 0
      %2614 = vmatpush1.bf16.msra.mxu0 %v2592
      %2615 = vmatprep.subr.bf16.mxu0 0
      %2616 = vmatpush1.bf16.msra.mxu0 %v2593
      %2617 = vmatprep.subr.bf16.mxu0 0
      %2618 = vmatpush1.bf16.msra.mxu0 %v2594
      %2619 = vmatprep.subr.bf16.mxu0 0
      %2620 = vmatpush1.bf16.msra.mxu0 0
      %2621 = vmatprep.subr.bf16.mxu0 0
      %2622 = vmatpush1.bf16.msra.mxu0 0
      %2623 = vmatprep.subr.bf16.mxu0 0
      %2624 = vmatpush1.bf16.msra.mxu0 0
      %2625 = vmatprep.subr.bf16.mxu0 0
      %2626 = vmatpush1.bf16.msra.mxu0 0
      %2627 = vmatprep.subr.bf16.mxu0 0
      %2628 = vmatpush1.bf16.msra.mxu0 0
      %2629 = vmatprep.subr.bf16.mxu0 0
      %2630 = vmatpush1.bf16.msra.mxu0 0
      %2631 = vmatprep.subr.bf16.mxu0 0
      %2632 = vmatpush1.bf16.msra.mxu0 0
      %2633 = vmatprep.subr.bf16.mxu0 0
      %2634 = vmatpush1.bf16.msra.mxu0 0
      %2635 = vmatprep.mubr.bf16.mxu0 0
      %2636 = vmatmul.mubr.bf16.gmra.mrb[0].mxu0 %v2516
      %v2637 = vpop.f32.mrb[0].mxu0
      %v2638 = vadd.f32 %v2553, %v2637
      %v2639 = vpop.f32.mrb[0].mxu0
      %v2640 = vpop.f32.mrb[0].mxu0
      %v2641 = vadd.f32 %v2553, %v2640
      %v2642 = vpop.f32.mrb[0].mxu0
      %2643 = vmatprep.mubr.bf16.mxu0 0
      %2644 = vmatmul.mubr.bf16.gmra.mrb[0].mxu0 %v2517
      %v2645 = vpop.f32.mrb[0].mxu0
      %v2646 = vadd.f32 %v2553, %v2645
      %v2647 = vpop.f32.mrb[0].mxu0
      %v2648 = vpop.f32.mrb[0].mxu0
      %v2649 = vadd.f32 %v2553, %v2648
      %v2650 = vpop.f32.mrb[0].mxu0
      %2651 = vmatprep.mubr.bf16.mxu0 0
      %2652 = vmatmul.mubr.bf16.gmra.mrb[0].mxu0 %v2518
      %v2653 = vpop.f32.mrb[0].mxu0
      %v2654 = vadd.f32 %v2553, %v2653
      %v2655 = vpop.f32.mrb[0].mxu0
      %v2656 = vpop.f32.mrb[0].mxu0
      %v2657 = vadd.f32 %v2553, %v2656
      %v2658 = vpop.f32.mrb[0].mxu0
      %2659 = vmatprep.mubr.bf16.mxu0 0
      %2660 = vmatmul.mubr.bf16.gmra.mrb[0].mxu0 %v2519
      %v2661 = vpop.f32.mrb[0].mxu0
      %v2662 = vadd.f32 %v2553, %v2661
      %v2663 = vpop.f32.mrb[0].mxu0
      %v2664 = vpop.f32.mrb[0].mxu0
      %v2665 = vadd.f32 %v2553, %v2664
      %v2666 = vpop.f32.mrb[0].mxu0
      %2667 = vmatprep.mubr.bf16.mxu0 0
      %2668 = vmatmul.mubr.bf16.gmra.mrb[0].mxu0 %v2520
      %v2669 = vpop.f32.mrb[0].mxu0
      %v2670 = vadd.f32 %v2553, %v2669
      %v2671 = vpop.f32.mrb[0].mxu0
      %v2672 = vpop.f32.mrb[0].mxu0
      %v2673 = vadd.f32 %v2553, %v2672
      %v2674 = vpop.f32.mrb[0].mxu0
      %2675 = vmatprep.mubr.bf16.mxu0 0
      %2676 = vmatmul.mubr.bf16.gmra.mrb[0].mxu0 %v2521
      %v2677 = vpop.f32.mrb[0].mxu0
      %v2678 = vadd.f32 %v2553, %v2677
      %v2679 = vpop.f32.mrb[0].mxu0
      %v2680 = vpop.f32.mrb[0].mxu0
      %v2681 = vadd.f32 %v2553, %v2680
      %v2682 = vpop.f32.mrb[0].mxu0
      %2683 = vmatprep.mubr.bf16.mxu0 0
      %2684 = vmatmul.mubr.bf16.gmra.mrb[0].mxu0 %v2522
      %v2685 = vpop.f32.mrb[0].mxu0
      %v2686 = vadd.f32 %v2553, %v2685
      %v2687 = vpop.f32.mrb[0].mxu0
      %v2688 = vpop.f32.mrb[0].mxu0
      %v2689 = vadd.f32 %v2553, %v2688
      %v2690 = vpop.f32.mrb[0].mxu0
      %2691 = vmatprep.mubr.bf16.mxu0 0
      %2692 = vmatmul.mubr.bf16.gmra.mrb[0].mxu0 %v2523
      %v2693 = vpop.f32.mrb[0].mxu0
      %v2694 = vadd.f32 %v2553, %v2693
      %v2695 = vpop.f32.mrb[0].mxu0
      %v2696 = vpop.f32.mrb[0].mxu0
      %v2697 = vadd.f32 %v2553, %v2696
      %v2698 = vpop.f32.mrb[0].mxu0
      %2699 = vmatprep.mubr.bf16.mxu0 0
      %2700 = vmatmul.mubr.bf16.gmra.mrb[0].mxu0 %v2524
      %v2701 = vpop.f32.mrb[0].mxu0
      %v2702 = vadd.f32 %v2553, %v2701
      %v2703 = vpop.f32.mrb[0].mxu0
      %v2704 = vpop.f32.mrb[0].mxu0
      %v2705 = vadd.f32 %v2553, %v2704
      %v2706 = vpop.f32.mrb[0].mxu0
      %2707 = vmatprep.mubr.bf16.mxu0 0
      %2708 = vmatmul.mubr.bf16.gmra.mrb[0].mxu0 %v2525
      %v2709 = vpop.f32.mrb[0].mxu0
      %v2710 = vadd.f32 %v2553, %v2709
      %v2711 = vpop.f32.mrb[0].mxu0
      %v2712 = vpop.f32.mrb[0].mxu0
      %v2713 = vadd.f32 %v2553, %v2712
      %v2714 = vpop.f32.mrb[0].mxu0
      %2715 = vmatprep.mubr.bf16.mxu0 0
      %2716 = vmatmul.mubr.bf16.gmra.mrb[0].mxu0 %v2526
      %v2717 = vpop.f32.mrb[0].mxu0
      %v2718 = vadd.f32 %v2553, %v2717
      %v2719 = vpop.f32.mrb[0].mxu0
      %v2720 = vpop.f32.mrb[0].mxu0
      %v2721 = vadd.f32 %v2553, %v2720
      %v2722 = vpop.f32.mrb[0].mxu0
      %2723 = vmatprep.mubr.bf16.mxu0 0
      %2724 = vmatmul.mubr.bf16.gmra.mrb[0].mxu0 %v2527
      %v2725 = vpop.f32.mrb[0].mxu0
      %v2726 = vadd.f32 %v2553, %v2725
      %v2727 = vpop.f32.mrb[0].mxu0
      %v2728 = vpop.f32.mrb[0].mxu0
      %v2729 = vadd.f32 %v2553, %v2728
      %v2730 = vpop.f32.mrb[0].mxu0
      %2731 = vmatprep.mubr.bf16.mxu0 0
      %2732 = vmatmul.mubr.bf16.gmra.mrb[0].mxu0 %v2528
      %v2733 = vpop.f32.mrb[0].mxu0
      %v2734 = vadd.f32 %v2553, %v2733
      %v2735 = vpop.f32.mrb[0].mxu0
      %v2736 = vpop.f32.mrb[0].mxu0
      %v2737 = vadd.f32 %v2553, %v2736
      %v2738 = vpop.f32.mrb[0].mxu0
      %2739 = vmatprep.mubr.bf16.mxu0 0
      %2740 = vmatmul.mubr.bf16.gmra.mrb[0].mxu0 %v2529
      %v2741 = vpop.f32.mrb[0].mxu0
      %v2742 = vadd.f32 %v2553, %v2741
      %v2743 = vpop.f32.mrb[0].mxu0
      %v2744 = vpop.f32.mrb[0].mxu0
      %v2745 = vadd.f32 %v2553, %v2744
      %v2746 = vpop.f32.mrb[0].mxu0
      %2747 = vmatprep.mubr.bf16.mxu0 0
      %2748 = vmatmul.mubr.bf16.gmra.mrb[0].mxu0 %v2530
      %v2749 = vpop.f32.mrb[0].mxu0
      %v2750 = vadd.f32 %v2553, %v2749
      %v2751 = vpop.f32.mrb[0].mxu0
      %v2752 = vpop.f32.mrb[0].mxu0
      %v2753 = vadd.f32 %v2553, %v2752
      %v2754 = vpop.f32.mrb[0].mxu0
      %2755 = vmatprep.mubr.bf16.mxu0 0
      %2756 = vmatmul.mubr.bf16.gmra.mrb[0].mxu0 %v2531
      %v2757 = vpop.f32.mrb[0].mxu0
      %v2758 = vadd.f32 %v2553, %v2757
      %v2759 = vpop.f32.mrb[0].mxu0
      %v2760 = vpop.f32.mrb[0].mxu0
      %v2761 = vadd.f32 %v2553, %v2760
      %v2762 = vpop.f32.mrb[0].mxu0
      %2763 = vdwg.mxu0
      %vm2764 = vcmp.ge.f32.partialorder %v2638, 0.0
      %vm2765 = vcmp.ge.f32.partialorder %v2641, 0.0
      %vm2766 = vcmp.ge.f32.partialorder %v2646, 0.0
      %vm2767 = vcmp.ge.f32.partialorder %v2649, 0.0
      %vm2768 = vcmp.ge.f32.partialorder %v2654, 0.0
      %vm2769 = vcmp.ge.f32.partialorder %v2657, 0.0
      %vm2770 = vcmp.ge.f32.partialorder %v2662, 0.0
      %vm2771 = vcmp.ge.f32.partialorder %v2665, 0.0
      %vm2772 = vcmp.ge.f32.partialorder %v2670, 0.0
      %vm2773 = vcmp.ge.f32.partialorder %v2673, 0.0
      %vm2774 = vcmp.ge.f32.partialorder %v2678, 0.0
      %vm2775 = vcmp.ge.f32.partialorder %v2681, 0.0
      %vm2776 = vcmp.ge.f32.partialorder %v2686, 0.0
      %vm2777 = vcmp.ge.f32.partialorder %v2689, 0.0
      %vm2778 = vcmp.ge.f32.partialorder %v2694, 0.0
      %vm2779 = vcmp.ge.f32.partialorder %v2697, 0.0
      %vm2780 = vcmp.ge.f32.partialorder %v2702, 0.0
      %vm2781 = vcmp.ge.f32.partialorder %v2705, 0.0
      %vm2782 = vcmp.ge.f32.partialorder %v2710, 0.0
      %vm2783 = vcmp.ge.f32.partialorder %v2713, 0.0
      %vm2784 = vcmp.ge.f32.partialorder %v2718, 0.0
      %vm2785 = vcmp.ge.f32.partialorder %v2721, 0.0
      %vm2786 = vcmp.ge.f32.partialorder %v2726, 0.0
      %vm2787 = vcmp.ge.f32.partialorder %v2729, 0.0
      %vm2788 = vcmp.ge.f32.partialorder %v2734, 0.0
      %vm2789 = vcmp.ge.f32.partialorder %v2737, 0.0
      %vm2790 = vcmp.ge.f32.partialorder %v2742, 0.0
      %vm2791 = vcmp.ge.f32.partialorder %v2745, 0.0
      %vm2792 = vcmp.ge.f32.partialorder %v2750, 0.0
      %vm2793 = vcmp.ge.f32.partialorder %v2753, 0.0
      %vm2794 = vcmp.ge.f32.partialorder %v2758, 0.0
      %vm2795 = vcmp.ge.f32.partialorder %v2761, 0.0
      %v2796 = vmul.f32 %v2638, 0.01
      %v2797 = vmul.f32 %v2641, 0.01
      %v2798 = vmul.f32 %v2646, 0.01
      %v2799 = vmul.f32 %v2649, 0.01
      %v2800 = vmul.f32 %v2654, 0.01
      %v2801 = vmul.f32 %v2657, 0.01
      %v2802 = vmul.f32 %v2662, 0.01
      %v2803 = vmul.f32 %v2665, 0.01
      %v2804 = vmul.f32 %v2670, 0.01
      %v2805 = vmul.f32 %v2673, 0.01
      %v2806 = vmul.f32 %v2678, 0.01
      %v2807 = vmul.f32 %v2681, 0.01
      %v2808 = vmul.f32 %v2686, 0.01
      %v2809 = vmul.f32 %v2689, 0.01
      %v2810 = vmul.f32 %v2694, 0.01
      %v2811 = vmul.f32 %v2697, 0.01
      %v2812 = vmul.f32 %v2702, 0.01
      %v2813 = vmul.f32 %v2705, 0.01
      %v2814 = vmul.f32 %v2710, 0.01
      %v2815 = vmul.f32 %v2713, 0.01
      %v2816 = vmul.f32 %v2718, 0.01
      %v2817 = vmul.f32 %v2721, 0.01
      %v2818 = vmul.f32 %v2726, 0.01
      %v2819 = vmul.f32 %v2729, 0.01
      %v2820 = vmul.f32 %v2734, 0.01
      %v2821 = vmul.f32 %v2737, 0.01
      %v2822 = vmul.f32 %v2742, 0.01
      %v2823 = vmul.f32 %v2745, 0.01
      %v2824 = vmul.f32 %v2750, 0.01
      %v2825 = vmul.f32 %v2753, 0.01
      %v2826 = vmul.f32 %v2758, 0.01
      %v2827 = vmul.f32 %v2761, 0.01
      %v2828 = vsel %vm2764, %v2638, %v2796
      %v2829 = vsel %vm2765, %v2641, %v2797
      %v2830 = vsel %vm2766, %v2646, %v2798
      %v2831 = vsel %vm2767, %v2649, %v2799
      %v2832 = vsel %vm2768, %v2654, %v2800
      %v2833 = vsel %vm2769, %v2657, %v2801
      %v2834 = vsel %vm2770, %v2662, %v2802
      %v2835 = vsel %vm2771, %v2665, %v2803
      %v2836 = vsel %vm2772, %v2670, %v2804
      %v2837 = vsel %vm2773, %v2673, %v2805
      %v2838 = vsel %vm2774, %v2678, %v2806
      %v2839 = vsel %vm2775, %v2681, %v2807
      %v2840 = vsel %vm2776, %v2686, %v2808
      %v2841 = vsel %vm2777, %v2689, %v2809
      %v2842 = vsel %vm2778, %v2694, %v2810
      %v2843 = vsel %vm2779, %v2697, %v2811
      %v2844 = vsel %vm2780, %v2702, %v2812
      %v2845 = vsel %vm2781, %v2705, %v2813
      %v2846 = vsel %vm2782, %v2710, %v2814
      %v2847 = vsel %vm2783, %v2713, %v2815
      %v2848 = vsel %vm2784, %v2718, %v2816
      %v2849 = vsel %vm2785, %v2721, %v2817
      %v2850 = vsel %vm2786, %v2726, %v2818
      %v2851 = vsel %vm2787, %v2729, %v2819
      %v2852 = vsel %vm2788, %v2734, %v2820
      %v2853 = vsel %vm2789, %v2737, %v2821
      %v2854 = vsel %vm2790, %v2742, %v2822
      %v2855 = vsel %vm2791, %v2745, %v2823
      %v2856 = vsel %vm2792, %v2750, %v2824
      %v2857 = vsel %vm2793, %v2753, %v2825
      %v2858 = vsel %vm2794, %v2758, %v2826
      %v2859 = vsel %vm2795, %v2761, %v2827
      %2860 = vst [vmem:[%s307] sm:$0xff] %v2828
      %2861 = vst [vmem:[%s307 + $0x8] sm:$0xff] %v2829
      %2862 = vst [vmem:[%s307 + $0x10] sm:$0xff] %v2830
      %2863 = vst [vmem:[%s307 + $0x18] sm:$0xff] %v2831
      %2864 = vst [vmem:[%s307 + $0x20] sm:$0xff] %v2832
      %2865 = vst [vmem:[%s307 + $0x28] sm:$0xff] %v2833
      %2866 = vst [vmem:[%s307 + $0x30] sm:$0xff] %v2834
      %2867 = vst [vmem:[%s307 + $0x38] sm:$0xff] %v2835
      %2868 = vst [vmem:[%s307 + $0x40] sm:$0xff] %v2836
      %2869 = vst [vmem:[%s307 + $0x48] sm:$0xff] %v2837
      %2870 = vst [vmem:[%s307 + $0x50] sm:$0xff] %v2838
      %2871 = vst [vmem:[%s307 + $0x58] sm:$0xff] %v2839
      %2872 = vst [vmem:[%s307 + $0x60] sm:$0xff] %v2840
      %2873 = vst [vmem:[%s307 + $0x68] sm:$0xff] %v2841
      %2874 = vst [vmem:[%s307 + $0x70] sm:$0xff] %v2842
      %2875 = vst [vmem:[%s307 + $0x78] sm:$0xff] %v2843
      %2876 = vst [vmem:[%s307 + $0x80] sm:$0xff] %v2844
      %2877 = vst [vmem:[%s307 + $0x88] sm:$0xff] %v2845
      %2878 = vst [vmem:[%s307 + $0x90] sm:$0xff] %v2846
      %2879 = vst [vmem:[%s307 + $0x98] sm:$0xff] %v2847
      %2880 = vst [vmem:[%s307 + $0xa0] sm:$0xff] %v2848
      %2881 = vst [vmem:[%s307 + $0xa8] sm:$0xff] %v2849
      %2882 = vst [vmem:[%s307 + $0xb0] sm:$0xff] %v2850
      %2883 = vst [vmem:[%s307 + $0xb8] sm:$0xff] %v2851
      %2884 = vst [vmem:[%s307 + $0xc0] sm:$0xff] %v2852
      %2885 = vst [vmem:[%s307 + $0xc8] sm:$0xff] %v2853
      %2886 = vst [vmem:[%s307 + $0xd0] sm:$0xff] %v2854
      %2887 = vst [vmem:[%s307 + $0xd8] sm:$0xff] %v2855
      %2888 = vst [vmem:[%s307 + $0xe0] sm:$0xff] %v2856
      %2889 = vst [vmem:[%s307 + $0xe8] sm:$0xff] %v2857
      %2890 = vst [vmem:[%s307 + $0xf0] sm:$0xff] %v2858
      %2891 = vst [vmem:[%s307 + $0xf8] sm:$0xff] %v2859
      %s2892 = smul.u32 32, %s19
      %p2893 = scmp.lt.s32.totalorder %s2892, 63
      %s2894 = scalar_select %p2893, %s2892, 63
      %s2895 = smul.addr %s2894, 8
      %s2896 = scalar_lea.vmem %s8, %s2895
      // Predicated region
      $region53: #{coord_mlp_encoder.1} parent=51 // pred_check
        %p2897 = pneg %p210
      $region54: #{coord_mlp_encoder.1} parent=51 // pred_check_branch
        %2899 = sbr.rel (%p2897) target = $region56
      $region55: #{coord_mlp_encoder.1} parent=51 // pred_region
        %s2900 = smul.u32 32, %s19
      $region56: #{coord_mlp_encoder.1} parent=51 // pred_fallthru
        _
    $region52: #{coord_mlp_encoder.1} parent=5 // pred_fallthru
      _
    %p2901 = scmp.le.s32.totalorder 2, %s14
    // Predicated region
    $region57: #{coord_mlp_encoder.1} parent=5 // pred_check
      %p2902 = pneg %p2901
    $region58: #{coord_mlp_encoder.1} parent=5 // pred_check_branch
      %2904 = sbr.rel (%p2902) target = $region60
    $region59: #{coord_mlp_encoder.1} parent=5 // pred_region
      %s2905 = ssub.s32 %s14, 2
      // Predicated region
      $region61: #{coord_mlp_encoder.1} parent=59 // pred_check
        %p2906 = pneg %p216
      $region62: #{coord_mlp_encoder.1} parent=59 // pred_check_branch
        %2908 = sbr.rel (%p2906) target = $region64
      $region63: #{coord_mlp_encoder.1} parent=59 // pred_region
        %s2909 = smul.u32 32, %s20
        %p2910 = scmp.lt.s32.totalorder %s2909, 63
        %s2911 = scalar_select %p2910, %s2909, 63
        %s2912 = smul.addr %s2911, 8
        %s2913 = scalar_lea.vmem %s8, %s2912
      $region64: #{coord_mlp_encoder.1} parent=59 // pred_fallthru
        _
    $region60: #{coord_mlp_encoder.1} parent=5 // pred_fallthru
      _
  $region6: #{coord_mlp_encoder.1} parent=0 // loop_footer
    %s18 = sadd.s32 1, %s14
  $region7: #{coord_mlp_encoder.1} parent=0 // loop_footer_branch
    %13 = sbr.rel target = $region3
  $region8: #{coord_mlp_encoder.1} parent=0 // loop_exit
    _

</llo_original>
